<compile_context>
chip_gen: v6e
topology: v6e:2x2x1
jax: 0.10.0
libtpu: 0.0.40
codegen_flags: <defaults>
</compile_context>

<pallas_src>
import jax
import jax.numpy as jnp
from jax.experimental import pallas as pl
from jax.experimental.pallas import tpu as pltpu


def _round_up(a, m):
    return ((a + m - 1) // m) * m


def generator_kernel(x_ref, n_ref,
                     w1a_ref, w1b_ref, b1_ref,
                     w2_ref, b2_ref,
                     w3_ref, b3_ref,
                     w4_ref, b4_ref,
                     o_ref):
    # One batch tile per grid step; all weights resident in VMEM.
    # bf16 MXU matmuls with fp32 accumulation; ReLUs / intermediates in bf16.
    bf16 = jnp.bfloat16
    f32 = jnp.float32

    # Layer 1, fused "concat": x @ W1a + noise @ W1b == cat([x, noise]) @ W1.
    acc = jnp.dot(x_ref[...].astype(bf16), w1a_ref[...], preferred_element_type=f32)
    acc = acc + jnp.dot(n_ref[...].astype(bf16), w1b_ref[...],
                        preferred_element_type=f32)
    # Downcast once after the bias add; ReLU in bf16 (identical numerics).
    h = jnp.maximum((acc + b1_ref[...]).astype(bf16), 0)

    # Layer 2
    acc = jnp.dot(h, w2_ref[...], preferred_element_type=f32)
    h = jnp.maximum((acc + b2_ref[...]).astype(bf16), 0)

    # Layer 3
    acc = jnp.dot(h, w3_ref[...], preferred_element_type=f32)
    h = jnp.maximum((acc + b3_ref[...]).astype(bf16), 0)

    # Layer 4 (no activation)
    acc = jnp.dot(h, w4_ref[...], preferred_element_type=f32) + b4_ref[...]
    o_ref[...] = acc.astype(o_ref.dtype)


def generator_forward(x, noise, params, *, tm=None):
    """x: [B, input_dim], noise: [B, noise_dim]  ->  [B, output_dim] (fp32)."""
    (w1a, w1b, b1), (w2, b2), (w3, b3), (w4, b4) = params
    B, in_dim = x.shape
    noise_dim = noise.shape[1]
    h1, h2, h3 = w2.shape[0], w3.shape[0], w4.shape[0]
    out_dim = w4.shape[1]

    # ---- batch tile selection -------------------------------------------
    # * large B: 512-row tiles amortize per-step pipeline overhead
    # * B >= 256: at least 2 tiles so both v7x TensorCores get work
    # * small B: one tile spanning the (sublane-rounded) batch
    if tm is None:
        if B >= 4096:
            tm = 512
        elif B >= 512:
            tm = 256
        elif B >= 256:
            tm = 128
        else:
            tm = _round_up(B, 8)
    tm = _round_up(int(tm), 8)

    # Pad the batch instead of a giant ragged tile / silently dropped rows.
    B_pad = _round_up(B, tm)
    if B_pad != B:
        x = jnp.pad(x, ((0, B_pad - B), (0, 0)))
        noise = jnp.pad(noise, ((0, B_pad - B), (0, 0)))
    grid = (B_pad // tm,)

    # ---- lane-dense output slab ------------------------------------------
    out_pad = _round_up(out_dim, 128)
    if out_pad != out_dim:
        w4 = jnp.pad(w4, ((0, 0), (0, out_pad - out_dim)))
        b4 = jnp.pad(b4, ((0, 0), (0, out_pad - out_dim)))

    def row_map(i):
        return (i, 0)

    def const_map(i):
        return (0, 0)

    def wspec(shape):
        # Constant block index across the grid -> single buffer is enough.
        return pl.BlockSpec(shape, const_map, pipeline_mode=pl.Buffered(1))

    in_specs = [
        pl.BlockSpec((tm, in_dim), row_map),        # x
        pl.BlockSpec((tm, noise_dim), row_map),     # noise
        wspec((in_dim, h1)),                        # w1a (bf16, resident)
        wspec((noise_dim, h1)),                     # w1b
        wspec((1, h1)),                             # b1
        wspec((h1, h2)),                            # w2
        wspec((1, h2)),                             # b2
        wspec((h2, h3)),                            # w3
        wspec((1, h3)),                             # b3
        wspec((h3, out_pad)),                       # w4
        wspec((1, out_pad)),                        # b4
    ]
    out_spec = pl.BlockSpec((tm, out_pad), row_map)

    # Advisory cost hint for XLA's scheduler around this short custom call.
    flops = 2 * B_pad * ((in_dim + noise_dim) * h1 + h1 * h2 + h2 * h3
                         + h3 * out_pad)
    weight_bytes = 2 * ((in_dim + noise_dim) * h1 + h1 * h2 + h2 * h3
                        + h3 * out_pad)
    bias_bytes = 4 * (h1 + h2 + h3 + out_pad)
    act_bytes = 4 * B_pad * (in_dim + noise_dim + out_pad)
    cost = pl.CostEstimate(flops=flops, transcendentals=0,
                           bytes_accessed=weight_bytes + bias_bytes + act_bytes)

    out = pl.pallas_call(
        generator_kernel,
        out_shape=jax.ShapeDtypeStruct((B_pad, out_pad), jnp.float32),
        grid=grid,
        in_specs=in_specs,
        out_specs=out_spec,
        cost_estimate=cost,
        compiler_params=pltpu.CompilerParams(
            dimension_semantics=("parallel",),
            # Above the 32 MiB scoped default, inside v7x's 64 MiB physical
            # VMEM; per-tile footprint at tm<=512 stays far below this.
            vmem_limit_bytes=48 << 20,
        ),
    )(x, noise, w1a, w1b, b1, w2, b2, w3, b3, w4, b4)

    if B_pad != B or out_pad != out_dim:
        out = out[:B, :out_dim]
    return out


def init_linear(key, fan_in, fan_out):
    # Deterministic init mimicking PyTorch's default U(-1/sqrt(fan_in), ...).
    kw, kb = jax.random.split(key)
    bound = 1.0 / jnp.sqrt(jnp.float32(fan_in))
    w = jax.random.uniform(kw, (fan_in, fan_out), jnp.float32, -bound, bound)
    b = jax.random.uniform(kb, (1, fan_out), jnp.float32, -bound, bound)
    return w.astype(jnp.bfloat16), b  # weights streamed as bf16, bias fp32


def make_params(keys, input_dim, noise_dim, output_dim):
    k1, k2, k3, k4 = keys
    w1, b1 = init_linear(k1, input_dim + noise_dim, 256)
    # Split W1 along its input axis so the concat can be fused in-kernel.
    w1a = w1[:input_dim, :]
    w1b = w1[input_dim:, :]
    return (
        (w1a, w1b, b1),
        init_linear(k2, 256, 512),
        init_linear(k3, 512, 1024),
        init_linear(k4, 1024, output_dim),
    )


def generator_reference(x, noise, params):
    # Mirrors the kernel's numerics: bf16 matmul inputs + bf16 intermediates,
    # fp32 accumulation.
    (w1a, w1b, b1), (w2, b2), (w3, b3), (w4, b4) = params
    bf16 = jnp.bfloat16
    f32 = jnp.float32
    acc = (jnp.dot(x.astype(bf16), w1a, preferred_element_type=f32)
           + jnp.dot(noise.astype(bf16), w1b, preferred_element_type=f32))
    h = jnp.maximum((acc + b1).astype(bf16), 0)
    h = jnp.maximum((jnp.dot(h, w2, preferred_element_type=f32) + b2).astype(bf16), 0)
    h = jnp.maximum((jnp.dot(h, w3, preferred_element_type=f32) + b3).astype(bf16), 0)
    return jnp.dot(h, w4, preferred_element_type=f32) + b4


if __name__ == "__main__":
    # Small, forward-consistent shapes.
    batch = 8
    input_dim = 16
    noise_dim = 16
    output_dim = 128

    key = jax.random.PRNGKey(0)
    kx, kn, k1, k2, k3, k4 = jax.random.split(key, 6)

    x = jax.random.normal(kx, (batch, input_dim), jnp.float32)
    noise = jax.random.normal(kn, (batch, noise_dim), jnp.float32)

    params = make_params((k1, k2, k3, k4), input_dim, noise_dim, output_dim)

    out = generator_forward(x, noise, params)
    out = jax.block_until_ready(out)

    ref = generator_reference(x, noise, params)
    assert out.shape == (batch, output_dim)
    assert jnp.allclose(out, ref, atol=2e-2, rtol=2e-2), float(
        jnp.max(jnp.abs(out - ref)))

    print("KERNEL_OK")
</pallas_src>

<mosaic_0001>
module attributes {stable_mosaic.version = 11 : i64} {
  func.func @generator_kernel(%arg0: i32, %arg1: memref<8x16xf32, #tpu.memory_space<vmem>>, %arg2: memref<8x16xf32, #tpu.memory_space<vmem>>, %arg3: memref<16x256xbf16, #tpu.memory_space<vmem>>, %arg4: memref<16x256xbf16, #tpu.memory_space<vmem>>, %arg5: memref<1x256xf32, #tpu.memory_space<vmem>>, %arg6: memref<256x512xbf16, #tpu.memory_space<vmem>>, %arg7: memref<1x512xf32, #tpu.memory_space<vmem>>, %arg8: memref<512x1024xbf16, #tpu.memory_space<vmem>>, %arg9: memref<1x1024xf32, #tpu.memory_space<vmem>>, %arg10: memref<1024x128xbf16, #tpu.memory_space<vmem>>, %arg11: memref<1x128xf32, #tpu.memory_space<vmem>>, %arg12: memref<8x128xf32, #tpu.memory_space<vmem>>) attributes {dimension_semantics = [#tpu.dimension_semantics<parallel>], iteration_bounds = array<i64: 1>, scalar_prefetch = 0 : i64, scratch_operands = 0 : i64, tpu.core_type = #tpu.core_type<tc>, window_params = [{transform_indices = @transform_0, window_bounds = array<i64: 8, 16>}, {transform_indices = @transform_1, window_bounds = array<i64: 8, 16>}, {pipeline_mode = #tpu.pipeline_mode<synchronous>, transform_indices = @transform_2, window_bounds = array<i64: 16, 256>}, {pipeline_mode = #tpu.pipeline_mode<synchronous>, transform_indices = @transform_3, window_bounds = array<i64: 16, 256>}, {pipeline_mode = #tpu.pipeline_mode<synchronous>, transform_indices = @transform_4, window_bounds = array<i64: 1, 256>}, {pipeline_mode = #tpu.pipeline_mode<synchronous>, transform_indices = @transform_5, window_bounds = array<i64: 256, 512>}, {pipeline_mode = #tpu.pipeline_mode<synchronous>, transform_indices = @transform_6, window_bounds = array<i64: 1, 512>}, {pipeline_mode = #tpu.pipeline_mode<synchronous>, transform_indices = @transform_7, window_bounds = array<i64: 512, 1024>}, {pipeline_mode = #tpu.pipeline_mode<synchronous>, transform_indices = @transform_8, window_bounds = array<i64: 1, 1024>}, {pipeline_mode = #tpu.pipeline_mode<synchronous>, transform_indices = @transform_9, window_bounds = array<i64: 1024, 128>}, {pipeline_mode = #tpu.pipeline_mode<synchronous>, transform_indices = @transform_10, window_bounds = array<i64: 1, 128>}, {transform_indices = @transform_11, window_bounds = array<i64: 8, 128>}]} {
    %c0 = arith.constant 0 : index
    %c0_0 = arith.constant 0 : index
    %0 = vector.load %arg1[%c0, %c0_0] : memref<8x16xf32, #tpu.memory_space<vmem>>, vector<8x16xf32>
    %1 = arith.truncf %0 : vector<8x16xf32> to vector<8x16xbf16>
    %c0_1 = arith.constant 0 : index
    %c0_2 = arith.constant 0 : index
    %2 = vector.load %arg3[%c0_1, %c0_2] : memref<16x256xbf16, #tpu.memory_space<vmem>>, vector<16x256xbf16>
    %cst = arith.constant dense<0.000000e+00> : vector<8x256xf32>
    %3 = tpu.matmul %1, %2, %cst {dimension_numbers = #tpu.dot_dimension_numbers<[1], [0], [0], [1], [0, 0, 1, 1], [], []>} : vector<8x16xbf16>, vector<16x256xbf16>, vector<8x256xf32> -> vector<8x256xf32>
    %c0_3 = arith.constant 0 : index
    %c0_4 = arith.constant 0 : index
    %4 = vector.load %arg2[%c0_3, %c0_4] : memref<8x16xf32, #tpu.memory_space<vmem>>, vector<8x16xf32>
    %5 = arith.truncf %4 : vector<8x16xf32> to vector<8x16xbf16>
    %c0_5 = arith.constant 0 : index
    %c0_6 = arith.constant 0 : index
    %6 = vector.load %arg4[%c0_5, %c0_6] : memref<16x256xbf16, #tpu.memory_space<vmem>>, vector<16x256xbf16>
    %cst_7 = arith.constant dense<0.000000e+00> : vector<8x256xf32>
    %7 = tpu.matmul %5, %6, %cst_7 {dimension_numbers = #tpu.dot_dimension_numbers<[1], [0], [0], [1], [0, 0, 1, 1], [], []>} : vector<8x16xbf16>, vector<16x256xbf16>, vector<8x256xf32> -> vector<8x256xf32>
    %8 = arith.addf %3, %7 : vector<8x256xf32>
    %c0_8 = arith.constant 0 : index
    %c0_9 = arith.constant 0 : index
    %9 = vector.load %arg5[%c0_8, %c0_9] : memref<1x256xf32, #tpu.memory_space<vmem>>, vector<1x256xf32>
    %10 = vector.broadcast %9 : vector<1x256xf32> to vector<8x256xf32>
    %11 = arith.addf %8, %10 : vector<8x256xf32>
    %12 = arith.truncf %11 : vector<8x256xf32> to vector<8x256xbf16>
    %cst_10 = arith.constant 0.000000e+00 : bf16
    %13 = vector.broadcast %cst_10 : bf16 to vector<8x256xbf16>
    %14 = arith.maximumf %12, %13 : vector<8x256xbf16>
    %c0_11 = arith.constant 0 : index
    %c0_12 = arith.constant 0 : index
    %15 = vector.load %arg6[%c0_11, %c0_12] : memref<256x512xbf16, #tpu.memory_space<vmem>>, vector<256x512xbf16>
    %cst_13 = arith.constant dense<0.000000e+00> : vector<8x512xf32>
    %16 = tpu.matmul %14, %15, %cst_13 {dimension_numbers = #tpu.dot_dimension_numbers<[1], [0], [0], [1], [0, 0, 1, 1], [], []>} : vector<8x256xbf16>, vector<256x512xbf16>, vector<8x512xf32> -> vector<8x512xf32>
    %c0_14 = arith.constant 0 : index
    %c0_15 = arith.constant 0 : index
    %17 = vector.load %arg7[%c0_14, %c0_15] : memref<1x512xf32, #tpu.memory_space<vmem>>, vector<1x512xf32>
    %18 = vector.broadcast %17 : vector<1x512xf32> to vector<8x512xf32>
    %19 = arith.addf %16, %18 : vector<8x512xf32>
    %20 = arith.truncf %19 : vector<8x512xf32> to vector<8x512xbf16>
    %cst_16 = arith.constant 0.000000e+00 : bf16
    %21 = vector.broadcast %cst_16 : bf16 to vector<8x512xbf16>
    %22 = arith.maximumf %20, %21 : vector<8x512xbf16>
    %c0_17 = arith.constant 0 : index
    %c0_18 = arith.constant 0 : index
    %23 = vector.load %arg8[%c0_17, %c0_18] : memref<512x1024xbf16, #tpu.memory_space<vmem>>, vector<512x1024xbf16>
    %cst_19 = arith.constant dense<0.000000e+00> : vector<8x1024xf32>
    %24 = tpu.matmul %22, %23, %cst_19 {dimension_numbers = #tpu.dot_dimension_numbers<[1], [0], [0], [1], [0, 0, 1, 1], [], []>} : vector<8x512xbf16>, vector<512x1024xbf16>, vector<8x1024xf32> -> vector<8x1024xf32>
    %c0_20 = arith.constant 0 : index
    %c0_21 = arith.constant 0 : index
    %25 = vector.load %arg9[%c0_20, %c0_21] : memref<1x1024xf32, #tpu.memory_space<vmem>>, vector<1x1024xf32>
    %26 = vector.broadcast %25 : vector<1x1024xf32> to vector<8x1024xf32>
    %27 = arith.addf %24, %26 : vector<8x1024xf32>
    %28 = arith.truncf %27 : vector<8x1024xf32> to vector<8x1024xbf16>
    %cst_22 = arith.constant 0.000000e+00 : bf16
    %29 = vector.broadcast %cst_22 : bf16 to vector<8x1024xbf16>
    %30 = arith.maximumf %28, %29 : vector<8x1024xbf16>
    %c0_23 = arith.constant 0 : index
    %c0_24 = arith.constant 0 : index
    %31 = vector.load %arg10[%c0_23, %c0_24] : memref<1024x128xbf16, #tpu.memory_space<vmem>>, vector<1024x128xbf16>
    %cst_25 = arith.constant dense<0.000000e+00> : vector<8x128xf32>
    %32 = tpu.matmul %30, %31, %cst_25 {dimension_numbers = #tpu.dot_dimension_numbers<[1], [0], [0], [1], [0, 0, 1, 1], [], []>} : vector<8x1024xbf16>, vector<1024x128xbf16>, vector<8x128xf32> -> vector<8x128xf32>
    %c0_26 = arith.constant 0 : index
    %c0_27 = arith.constant 0 : index
    %33 = vector.load %arg11[%c0_26, %c0_27] : memref<1x128xf32, #tpu.memory_space<vmem>>, vector<1x128xf32>
    %34 = vector.broadcast %33 : vector<1x128xf32> to vector<8x128xf32>
    %35 = arith.addf %32, %34 : vector<8x128xf32>
    %c0_28 = arith.constant 0 : index
    %c0_29 = arith.constant 0 : index
    %36 = vector.load %arg12[%c0_28, %c0_29] : memref<8x128xf32, #tpu.memory_space<vmem>>, vector<8x128xf32>
    tpu.vector_store %arg12[%c0_28, %c0_29], %35 {strides = array<i32>} : memref<8x128xf32, #tpu.memory_space<vmem>>, vector<8x128xf32>,
    return
  }
  func.func @transform_0(%arg0: i32) -> (i32, i32) {
    %c0_i32 = arith.constant 0 : i32
    %c0_i32_0 = arith.constant 0 : i32
    return %arg0, %c0_i32 : i32, i32
  }
  func.func @transform_1(%arg0: i32) -> (i32, i32) {
    %c0_i32 = arith.constant 0 : i32
    %c0_i32_0 = arith.constant 0 : i32
    return %arg0, %c0_i32 : i32, i32
  }
  func.func @transform_2(%arg0: i32) -> (i32, i32) {
    %c0_i32 = arith.constant 0 : i32
    %c0_i32_0 = arith.constant 0 : i32
    %c0_i32_1 = arith.constant 0 : i32
    return %c0_i32, %c0_i32_0 : i32, i32
  }
  func.func @transform_3(%arg0: i32) -> (i32, i32) {
    %c0_i32 = arith.constant 0 : i32
    %c0_i32_0 = arith.constant 0 : i32
    %c0_i32_1 = arith.constant 0 : i32
    return %c0_i32, %c0_i32_0 : i32, i32
  }
  func.func @transform_4(%arg0: i32) -> (i32, i32) {
    %c0_i32 = arith.constant 0 : i32
    %c0_i32_0 = arith.constant 0 : i32
    %c0_i32_1 = arith.constant 0 : i32
    return %c0_i32, %c0_i32_0 : i32, i32
  }
  func.func @transform_5(%arg0: i32) -> (i32, i32) {
    %c0_i32 = arith.constant 0 : i32
    %c0_i32_0 = arith.constant 0 : i32
    %c0_i32_1 = arith.constant 0 : i32
    return %c0_i32, %c0_i32_0 : i32, i32
  }
  func.func @transform_6(%arg0: i32) -> (i32, i32) {
    %c0_i32 = arith.constant 0 : i32
    %c0_i32_0 = arith.constant 0 : i32
    %c0_i32_1 = arith.constant 0 : i32
    return %c0_i32, %c0_i32_0 : i32, i32
  }
  func.func @transform_7(%arg0: i32) -> (i32, i32) {
    %c0_i32 = arith.constant 0 : i32
    %c0_i32_0 = arith.constant 0 : i32
    %c0_i32_1 = arith.constant 0 : i32
    return %c0_i32, %c0_i32_0 : i32, i32
  }
  func.func @transform_8(%arg0: i32) -> (i32, i32) {
    %c0_i32 = arith.constant 0 : i32
    %c0_i32_0 = arith.constant 0 : i32
    %c0_i32_1 = arith.constant 0 : i32
    return %c0_i32, %c0_i32_0 : i32, i32
  }
  func.func @transform_9(%arg0: i32) -> (i32, i32) {
    %c0_i32 = arith.constant 0 : i32
    %c0_i32_0 = arith.constant 0 : i32
    %c0_i32_1 = arith.constant 0 : i32
    return %c0_i32, %c0_i32_0 : i32, i32
  }
  func.func @transform_10(%arg0: i32) -> (i32, i32) {
    %c0_i32 = arith.constant 0 : i32
    %c0_i32_0 = arith.constant 0 : i32
    %c0_i32_1 = arith.constant 0 : i32
    return %c0_i32, %c0_i32_0 : i32, i32
  }
  func.func @transform_11(%arg0: i32) -> (i32, i32) {
    %c0_i32 = arith.constant 0 : i32
    %c0_i32_0 = arith.constant 0 : i32
    return %arg0, %c0_i32 : i32, i32
  }
}

</mosaic_0001>

<llo_original>
// kernel: tpu_custom_call.1
$region0: #{tpu_custom_call.1}
  #allocation0 [shape = 'u32[]', space=smem, size = 0x4, offset = 0x4, fixed_abs, tag = 'smem constant byte address 0x4 - core index']
  #allocation1 [shape = 'u32[144,128]{1,0:T(1,128)}', space=vmem, size = 0x12000, scoped, tag = 'internal scratch']
  %s0 = inlined_call_operand.hbm [shape: f32[8,16], index: 0, kind: input, shape index: {}]
  %s1 = inlined_call_operand.hbm [shape: f32[8,16], index: 1, kind: input, shape index: {}]
  %s2 = inlined_call_operand.hbm [shape: bf16[16,256], index: 2, kind: input, shape index: {}]
  %s3 = inlined_call_operand.hbm [shape: bf16[16,256], index: 3, kind: input, shape index: {}]
  %s4 = inlined_call_operand.vmem [shape: f32[1,256], index: 4, kind: input, shape index: {}]
  %s5 = inlined_call_operand.hbm [shape: bf16[256,512], index: 5, kind: input, shape index: {}]
  %s6 = inlined_call_operand.vmem [shape: f32[1,512], index: 6, kind: input, shape index: {}]
  %s7 = inlined_call_operand.hbm [shape: bf16[512,1024], index: 7, kind: input, shape index: {}]
  %s8 = inlined_call_operand.vmem [shape: f32[1,1024], index: 8, kind: input, shape index: {}]
  %s9 = inlined_call_operand.hbm [shape: bf16[1024,128], index: 9, kind: input, shape index: {}]
  %s10 = inlined_call_operand.vmem [shape: f32[1,128], index: 10, kind: input, shape index: {}]
  %s11 = inlined_call_operand.hbm [shape: f32[8,128], index: 11, kind: output, shape index: {}]
  %s12 = sld [smem:[#allocation0]]
  $region82: #{tpu_custom_call.1} parent=0
    _
  %s14 = ssub.s32 1, %s12
  %s15 = scalar_select 0, %s14, %s12
  $region1: #{tpu_custom_call.1} parent=0
    #allocation2 [shape = 'u8[4096]{0}', space=vmem, size = 0x1000, scoped, tag = 'input window, operand 0, single buffered']
    #allocation3 [shape = 's32[1]{0}', space=sflag, size = 0x4, scoped, tag = 'scoped memory for tpu_custom_call.1']
    #allocation4 [shape = 's32[1]{0}', space=sflag, size = 0x4, scoped, tag = 'scoped memory for tpu_custom_call.1']
    #allocation5 [shape = 'u8[4096]{0}', space=vmem, size = 0x1000, scoped, tag = 'input window, operand 1, single buffered']
    #allocation6 [shape = 's32[1]{0}', space=sflag, size = 0x4, scoped, tag = 'scoped memory for tpu_custom_call.1']
    #allocation7 [shape = 'u8[8192]{0}', space=vmem, size = 0x2000, scoped, tag = 'input window, operand 2, single buffered']
    #allocation8 [shape = 'u8[8192]{0}', space=vmem, size = 0x2000, scoped, tag = 'input window, operand 3, single buffered']
    #allocation9 [shape = 's32[1]{0}', space=sflag, size = 0x4, scoped, tag = 'scoped memory for tpu_custom_call.1']
    #allocation10 [shape = 'u8[262144]{0}', space=vmem, size = 0x40000, scoped, tag = 'input window, operand 5, single buffered']
    #allocation11 [shape = 'u8[1048576]{0}', space=vmem, size = 0x100000, scoped, tag = 'input window, operand 7, single buffered']
    #allocation12 [shape = 's32[1]{0}', space=sflag, size = 0x4, scoped, tag = 'scoped memory for tpu_custom_call.1']
    #allocation13 [shape = 'u8[262144]{0}', space=vmem, size = 0x40000, scoped, tag = 'input window, operand 9, single buffered']
    #allocation14 [shape = 'u8[4096]{0}', space=vmem, size = 0x1000, scoped, tag = 'output window, operand 0, single buffered']
    %16 = vsyncpa [#allocation3], 0
    %17 = vsyncpa [#allocation6], 0
    %18 = vsyncpa [#allocation9], 0
    %19 = vsyncpa [#allocation12], 0
    %20 = vsyncpa [#allocation4], 0
    // Predicated region
    $region2: #{tpu_custom_call.1} parent=1 // pred_check
      _
    $region3: #{tpu_custom_call.1} parent=1 // pred_check_branch
      %22 = sbr.rel (0) target = $region5
    $region4: #{tpu_custom_call.1} parent=1 // pred_region
      %s24 = ssub.s32 128, 128
      %25 = vsyncadd [#allocation3], %s24
      %s27 = sshll.u32 [#allocation2], 4
      %s28 = int_to_ptr.vmem [resolvable:$true] %s27
      %30 = dma.hbm_to_vmem [thread:$0]  %s0, 128, %s28, [#allocation3]
    $region5: #{tpu_custom_call.1} parent=1 // pred_fallthru
      _
    // Predicated region
    $region6: #{tpu_custom_call.1} parent=1 // pred_check
      _
    $region7: #{tpu_custom_call.1} parent=1 // pred_check_branch
      %32 = sbr.rel (0) target = $region9
    $region8: #{tpu_custom_call.1} parent=1 // pred_region
      %s34 = ssub.s32 128, 128
      %35 = vsyncadd [#allocation6], %s34
      %s37 = sshll.u32 [#allocation5], 4
      %s38 = int_to_ptr.vmem [resolvable:$true] %s37
      %40 = dma.hbm_to_vmem [thread:$0]  %s1, 128, %s38, [#allocation6]
    $region9: #{tpu_custom_call.1} parent=1 // pred_fallthru
      _
    // Predicated region
    $region10: #{tpu_custom_call.1} parent=1 // pred_check
      _
    $region11: #{tpu_custom_call.1} parent=1 // pred_check_branch
      %42 = sbr.rel (0) target = $region13
    $region12: #{tpu_custom_call.1} parent=1 // pred_region
      %s44 = ssub.s32 256, 256
      %45 = vsyncadd [#allocation6], %s44
      %s46 = sshll.u32 [#allocation7], 4
      %s47 = int_to_ptr.vmem [resolvable:$true] %s46
      %52 = dma.hbm_to_vmem [thread:$0]  %s2, 256, %s47, [#allocation6], 128, 128, 8
    $region13: #{tpu_custom_call.1} parent=1 // pred_fallthru
      _
    // Predicated region
    $region14: #{tpu_custom_call.1} parent=1 // pred_check
      _
    $region15: #{tpu_custom_call.1} parent=1 // pred_check_branch
      %54 = sbr.rel (0) target = $region17
    $region16: #{tpu_custom_call.1} parent=1 // pred_region
      %s56 = ssub.s32 256, 256
      %57 = vsyncadd [#allocation9], %s56
      %s58 = sshll.u32 [#allocation8], 4
      %s59 = int_to_ptr.vmem [resolvable:$true] %s58
      %64 = dma.hbm_to_vmem [thread:$0]  %s3, 256, %s59, [#allocation9], 128, 128, 8
    $region17: #{tpu_custom_call.1} parent=1 // pred_fallthru
      _
    // Predicated region
    $region18: #{tpu_custom_call.1} parent=1 // pred_check
      _
    $region19: #{tpu_custom_call.1} parent=1 // pred_check_branch
      %66 = sbr.rel (0) target = $region21
    $region20: #{tpu_custom_call.1} parent=1 // pred_region
      _
    $region21: #{tpu_custom_call.1} parent=1 // pred_fallthru
      _
    // Predicated region
    $region22: #{tpu_custom_call.1} parent=1 // pred_check
      _
    $region23: #{tpu_custom_call.1} parent=1 // pred_check_branch
      %68 = sbr.rel (0) target = $region25
    $region24: #{tpu_custom_call.1} parent=1 // pred_region
      %s70 = ssub.s32 8192, 8192
      %71 = vsyncadd [#allocation9], %s70
      %s72 = sshll.u32 [#allocation10], 4
      %s73 = int_to_ptr.vmem [resolvable:$true] %s72
      %78 = dma.hbm_to_vmem [thread:$0]  %s5, 8192, %s73, [#allocation9], 256, 256, 16
    $region25: #{tpu_custom_call.1} parent=1 // pred_fallthru
      _
    // Predicated region
    $region26: #{tpu_custom_call.1} parent=1 // pred_check
      _
    $region27: #{tpu_custom_call.1} parent=1 // pred_check_branch
      %80 = sbr.rel (0) target = $region29
    $region28: #{tpu_custom_call.1} parent=1 // pred_region
      _
    $region29: #{tpu_custom_call.1} parent=1 // pred_fallthru
      _
    // Predicated region
    $region30: #{tpu_custom_call.1} parent=1 // pred_check
      _
    $region31: #{tpu_custom_call.1} parent=1 // pred_check_branch
      %82 = sbr.rel (0) target = $region33
    $region32: #{tpu_custom_call.1} parent=1 // pred_region
      %s84 = ssub.s32 32768, 32768
      %85 = vsyncadd [#allocation12], %s84
      %s86 = sshll.u32 [#allocation11], 4
      %s87 = int_to_ptr.vmem [resolvable:$true] %s86
      %92 = dma.hbm_to_vmem [thread:$0]  %s7, 32768, %s87, [#allocation12], 512, 512, 32
    $region33: #{tpu_custom_call.1} parent=1 // pred_fallthru
      _
    // Predicated region
    $region34: #{tpu_custom_call.1} parent=1 // pred_check
      _
    $region35: #{tpu_custom_call.1} parent=1 // pred_check_branch
      %94 = sbr.rel (0) target = $region37
    $region36: #{tpu_custom_call.1} parent=1 // pred_region
      _
    $region37: #{tpu_custom_call.1} parent=1 // pred_fallthru
      _
    // Predicated region
    $region38: #{tpu_custom_call.1} parent=1 // pred_check
      _
    $region39: #{tpu_custom_call.1} parent=1 // pred_check_branch
      %96 = sbr.rel (0) target = $region41
    $region40: #{tpu_custom_call.1} parent=1 // pred_region
      %s98 = ssub.s32 8192, 8192
      %99 = vsyncadd [#allocation12], %s98
      %s100 = sshll.u32 [#allocation13], 4
      %s101 = int_to_ptr.vmem [resolvable:$true] %s100
      %106 = dma.hbm_to_vmem [thread:$0]  %s9, 8192, %s101, [#allocation12], 64, 64, 4
    $region41: #{tpu_custom_call.1} parent=1 // pred_fallthru
      _
    // Predicated region
    $region42: #{tpu_custom_call.1} parent=1 // pred_check
      _
    $region43: #{tpu_custom_call.1} parent=1 // pred_check_branch
      %108 = sbr.rel (0) target = $region45
    $region44: #{tpu_custom_call.1} parent=1 // pred_region
      _
    $region45: #{tpu_custom_call.1} parent=1 // pred_fallthru
      _
    // Predicated region
    $region46: #{tpu_custom_call.1} parent=1 // pred_check
      _
    $region47: #{tpu_custom_call.1} parent=1 // pred_check_branch
      %110 = sbr.rel (0) target = $region49
    $region48: #{tpu_custom_call.1} parent=1 // pred_region
      %111 = dma.done [#allocation3], 128
    $region49: #{tpu_custom_call.1} parent=1 // pred_fallthru
      _
    // Predicated region
    $region50: #{tpu_custom_call.1} parent=1 // pred_check
      _
    $region51: #{tpu_custom_call.1} parent=1 // pred_check_branch
      %113 = sbr.rel (0) target = $region53
    $region52: #{tpu_custom_call.1} parent=1 // pred_region
      %114 = dma.done [#allocation6], 128
    $region53: #{tpu_custom_call.1} parent=1 // pred_fallthru
      _
    // Predicated region
    $region54: #{tpu_custom_call.1} parent=1 // pred_check
      _
    $region55: #{tpu_custom_call.1} parent=1 // pred_check_branch
      %116 = sbr.rel (0) target = $region57
    $region56: #{tpu_custom_call.1} parent=1 // pred_region
      %117 = dma.done [#allocation6], 256
    $region57: #{tpu_custom_call.1} parent=1 // pred_fallthru
      _
    // Predicated region
    $region58: #{tpu_custom_call.1} parent=1 // pred_check
      _
    $region59: #{tpu_custom_call.1} parent=1 // pred_check_branch
      %119 = sbr.rel (0) target = $region61
    $region60: #{tpu_custom_call.1} parent=1 // pred_region
      %120 = dma.done [#allocation9], 256
    $region61: #{tpu_custom_call.1} parent=1 // pred_fallthru
      _
    // Predicated region
    $region62: #{tpu_custom_call.1} parent=1 // pred_check
      _
    $region63: #{tpu_custom_call.1} parent=1 // pred_check_branch
      %122 = sbr.rel (0) target = $region65
    $region64: #{tpu_custom_call.1} parent=1 // pred_region
      %123 = dma.done [#allocation9], 8192
    $region65: #{tpu_custom_call.1} parent=1 // pred_fallthru
      _
    // Predicated region
    $region66: #{tpu_custom_call.1} parent=1 // pred_check
      _
    $region67: #{tpu_custom_call.1} parent=1 // pred_check_branch
      %125 = sbr.rel (0) target = $region69
    $region68: #{tpu_custom_call.1} parent=1 // pred_region
      %126 = dma.done [#allocation12], 32768
    $region69: #{tpu_custom_call.1} parent=1 // pred_fallthru
      _
    // Predicated region
    $region70: #{tpu_custom_call.1} parent=1 // pred_check
      _
    $region71: #{tpu_custom_call.1} parent=1 // pred_check_branch
      %128 = sbr.rel (0) target = $region73
    $region72: #{tpu_custom_call.1} parent=1 // pred_region
      %129 = dma.done [#allocation12], 8192
    $region73: #{tpu_custom_call.1} parent=1 // pred_fallthru
      _
    %v131 = vld [vmem:[#allocation2] sm:$0xff]
    %v132 = vpack.c.bf16 %v131, %v131
    %v133 = vld [vmem:[#allocation7] sm:$0xff]
    %v134 = vld [vmem:[#allocation7 + $0x8] sm:$0xff]
    %v135 = vld [vmem:[#allocation5] sm:$0xff]
    %v136 = vpack.c.bf16 %v135, %v135
    %v137 = vld [vmem:[#allocation8] sm:$0xff]
    %v138 = vld [vmem:[#allocation8 + $0x8] sm:$0xff]
    %v141 = vunpack.c.l.b16 %v137
    %v142 = vunpack.c.h.b16 %v137
    %v143 = vunpack.c.l.b16 %v138
    %v144 = vunpack.c.h.b16 %v138
    %v145 = vpack.c.b16 %v143, %v141
    %v146 = vpack.c.b16 %v144, %v142
    %vm149 = vcmask 130048
    %v151 = vsel %vm149, %v136, 0
    %153 = vmatprep.subr.bf16.mxu0 0
    %154 = vmatpush1.bf16.msra.mxu0 0
    %155 = vmatprep.subr.bf16.mxu0 0
    %156 = vmatpush1.bf16.msra.mxu0 0
    %157 = vmatprep.subr.bf16.mxu0 0
    %158 = vmatpush1.bf16.msra.mxu0 0
    %159 = vmatprep.subr.bf16.mxu0 0
    %160 = vmatpush1.bf16.msra.mxu0 0
    %161 = vmatprep.subr.bf16.mxu0 0
    %162 = vmatpush1.bf16.msra.mxu0 0
    %163 = vmatprep.subr.bf16.mxu0 0
    %164 = vmatpush1.bf16.msra.mxu0 0
    %165 = vmatprep.subr.bf16.mxu0 0
    %166 = vmatpush1.bf16.msra.mxu0 0
    %167 = vmatprep.subr.bf16.mxu0 %v146
    %168 = vmatpush1.bf16.msra.mxu0 %v145
    %169 = vmatprep.subr.bf16.mxu0 0
    %170 = vmatpush2.bf16.msra.mxu0 0
    %171 = vmatprep.subr.bf16.mxu0 0
    %172 = vmatpush2.bf16.msra.mxu0 0
    %173 = vmatprep.subr.bf16.mxu0 0
    %174 = vmatpush2.bf16.msra.mxu0 0
    %175 = vmatprep.subr.bf16.mxu0 0
    %176 = vmatpush2.bf16.msra.mxu0 0
    %177 = vmatprep.subr.bf16.mxu0 0
    %178 = vmatpush2.bf16.msra.mxu0 0
    %179 = vmatprep.subr.bf16.mxu0 0
    %180 = vmatpush2.bf16.msra.mxu0 0
    %181 = vmatprep.subr.bf16.mxu0 0
    %182 = vmatpush2.bf16.msra.mxu0 0
    %183 = vmatprep.subr.bf16.mxu0 0
    %184 = vmatpush2.bf16.msra.mxu0 0
    %185 = vmatprep.mubr.bf16.mxu0 0
    %186 = vmatmul.mubr.bf16.gmra.mxu0 %v151
    %v187 = vpop.f32.mrf.mxu0
    %v188 = vadd.f32 0.0, %v187
    %v189 = vpop.f32.mrf.mxu0
    %v190 = vadd.f32 0.0, %v189
    %v191 = vpop.f32.mrf.mxu0
    %v192 = vpop.f32.mrf.mxu0
    %193 = vdwg.mxu0
    %v196 = vunpack.c.l.b16 %v133
    %v197 = vunpack.c.h.b16 %v133
    %v198 = vunpack.c.l.b16 %v134
    %v199 = vunpack.c.h.b16 %v134
    %v200 = vpack.c.b16 %v198, %v196
    %v201 = vpack.c.b16 %v199, %v197
    %v205 = vsel %vm149, %v132, 0
    %207 = vmatprep.subr.bf16.mxu0 0
    %208 = vmatpush1.bf16.msra.mxu0 0
    %209 = vmatprep.subr.bf16.mxu0 0
    %210 = vmatpush1.bf16.msra.mxu0 0
    %211 = vmatprep.subr.bf16.mxu0 0
    %212 = vmatpush1.bf16.msra.mxu0 0
    %213 = vmatprep.subr.bf16.mxu0 0
    %214 = vmatpush1.bf16.msra.mxu0 0
    %215 = vmatprep.subr.bf16.mxu0 0
    %216 = vmatpush1.bf16.msra.mxu0 0
    %217 = vmatprep.subr.bf16.mxu0 0
    %218 = vmatpush1.bf16.msra.mxu0 0
    %219 = vmatprep.subr.bf16.mxu0 0
    %220 = vmatpush1.bf16.msra.mxu0 0
    %221 = vmatprep.subr.bf16.mxu0 %v201
    %222 = vmatpush1.bf16.msra.mxu0 %v200
    %223 = vmatprep.subr.bf16.mxu0 0
    %224 = vmatpush2.bf16.msra.mxu0 0
    %225 = vmatprep.subr.bf16.mxu0 0
    %226 = vmatpush2.bf16.msra.mxu0 0
    %227 = vmatprep.subr.bf16.mxu0 0
    %228 = vmatpush2.bf16.msra.mxu0 0
    %229 = vmatprep.subr.bf16.mxu0 0
    %230 = vmatpush2.bf16.msra.mxu0 0
    %231 = vmatprep.subr.bf16.mxu0 0
    %232 = vmatpush2.bf16.msra.mxu0 0
    %233 = vmatprep.subr.bf16.mxu0 0
    %234 = vmatpush2.bf16.msra.mxu0 0
    %235 = vmatprep.subr.bf16.mxu0 0
    %236 = vmatpush2.bf16.msra.mxu0 0
    %237 = vmatprep.subr.bf16.mxu0 0
    %238 = vmatpush2.bf16.msra.mxu0 0
    %239 = vmatprep.mubr.bf16.mxu0 0
    %240 = vmatmul.mubr.bf16.gmra.mxu0 %v205
    %v241 = vpop.f32.mrf.mxu0
    %v242 = vadd.f32 %v188, %v241
    %v243 = vpop.f32.mrf.mxu0
    %v244 = vadd.f32 %v190, %v243
    %v245 = vpop.f32.mrf.mxu0
    %v246 = vpop.f32.mrf.mxu0
    %247 = vdwg.mxu0
    %v248 = vld [vmem:[%s4] sm:$0x3]
    %v250 = vlaneseq
    %v251 = vshrl.u32 %v250, 7
    %v252 = vsub.s32 0, %v251
    %v253 = vrot.slane %v248, %v252
    %v254 = vlaneseq
    %v255 = vshrl.u32 %v254, 7
    %v256 = vsub.s32 1, %v255
    %v257 = vrot.slane %v248, %v256
    %v260 = vadd.f32 %v242, %v253
    %v261 = vadd.f32 %v244, %v257
    %v262 = vpack.c.bf16 %v260, %v260
    %v263 = vpack.c.bf16 %v261, %v261
    %v264 = vmax.bf16 %v262, 0
    %v265 = vmax.bf16 %v263, 0
    %v266 = vld [vmem:[#allocation10] sm:$0xff]
    %v267 = vld [vmem:[#allocation10 + $0x8] sm:$0xff]
    %v268 = vld [vmem:[#allocation10 + $0x10] sm:$0xff]
    %v269 = vld [vmem:[#allocation10 + $0x18] sm:$0xff]
    %v270 = vld [vmem:[#allocation10 + $0x20] sm:$0xff]
    %v271 = vld [vmem:[#allocation10 + $0x28] sm:$0xff]
    %v272 = vld [vmem:[#allocation10 + $0x30] sm:$0xff]
    %v273 = vld [vmem:[#allocation10 + $0x38] sm:$0xff]
    %v274 = vld [vmem:[#allocation10 + $0x40] sm:$0xff]
    %v275 = vld [vmem:[#allocation10 + $0x48] sm:$0xff]
    %v276 = vld [vmem:[#allocation10 + $0x50] sm:$0xff]
    %v277 = vld [vmem:[#allocation10 + $0x58] sm:$0xff]
    %v278 = vld [vmem:[#allocation10 + $0x60] sm:$0xff]
    %v279 = vld [vmem:[#allocation10 + $0x68] sm:$0xff]
    %v280 = vld [vmem:[#allocation10 + $0x70] sm:$0xff]
    %v281 = vld [vmem:[#allocation10 + $0x78] sm:$0xff]
    %v282 = vld [vmem:[#allocation10 + $0x80] sm:$0xff]
    %v283 = vld [vmem:[#allocation10 + $0x88] sm:$0xff]
    %v284 = vld [vmem:[#allocation10 + $0x90] sm:$0xff]
    %v285 = vld [vmem:[#allocation10 + $0x98] sm:$0xff]
    %v286 = vld [vmem:[#allocation10 + $0xa0] sm:$0xff]
    %v287 = vld [vmem:[#allocation10 + $0xa8] sm:$0xff]
    %v288 = vld [vmem:[#allocation10 + $0xb0] sm:$0xff]
    %v289 = vld [vmem:[#allocation10 + $0xb8] sm:$0xff]
    %v290 = vld [vmem:[#allocation10 + $0xc0] sm:$0xff]
    %v291 = vld [vmem:[#allocation10 + $0xc8] sm:$0xff]
    %v292 = vld [vmem:[#allocation10 + $0xd0] sm:$0xff]
    %v293 = vld [vmem:[#allocation10 + $0xd8] sm:$0xff]
    %v294 = vld [vmem:[#allocation10 + $0xe0] sm:$0xff]
    %v295 = vld [vmem:[#allocation10 + $0xe8] sm:$0xff]
    %v296 = vld [vmem:[#allocation10 + $0xf0] sm:$0xff]
    %v297 = vld [vmem:[#allocation10 + $0xf8] sm:$0xff]
    %v298 = vld [vmem:[#allocation10 + $0x100] sm:$0xff]
    %v299 = vld [vmem:[#allocation10 + $0x108] sm:$0xff]
    %v300 = vld [vmem:[#allocation10 + $0x110] sm:$0xff]
    %v301 = vld [vmem:[#allocation10 + $0x118] sm:$0xff]
    %v302 = vld [vmem:[#allocation10 + $0x120] sm:$0xff]
    %v303 = vld [vmem:[#allocation10 + $0x128] sm:$0xff]
    %v304 = vld [vmem:[#allocation10 + $0x130] sm:$0xff]
    %v305 = vld [vmem:[#allocation10 + $0x138] sm:$0xff]
    %v306 = vld [vmem:[#allocation10 + $0x140] sm:$0xff]
    %v307 = vld [vmem:[#allocation10 + $0x148] sm:$0xff]
    %v308 = vld [vmem:[#allocation10 + $0x150] sm:$0xff]
    %v309 = vld [vmem:[#allocation10 + $0x158] sm:$0xff]
    %v310 = vld [vmem:[#allocation10 + $0x160] sm:$0xff]
    %v311 = vld [vmem:[#allocation10 + $0x168] sm:$0xff]
    %v312 = vld [vmem:[#allocation10 + $0x170] sm:$0xff]
    %v313 = vld [vmem:[#allocation10 + $0x178] sm:$0xff]
    %v314 = vld [vmem:[#allocation10 + $0x180] sm:$0xff]
    %v315 = vld [vmem:[#allocation10 + $0x188] sm:$0xff]
    %v316 = vld [vmem:[#allocation10 + $0x190] sm:$0xff]
    %v317 = vld [vmem:[#allocation10 + $0x198] sm:$0xff]
    %v318 = vld [vmem:[#allocation10 + $0x1a0] sm:$0xff]
    %v319 = vld [vmem:[#allocation10 + $0x1a8] sm:$0xff]
    %v320 = vld [vmem:[#allocation10 + $0x1b0] sm:$0xff]
    %v321 = vld [vmem:[#allocation10 + $0x1b8] sm:$0xff]
    %v322 = vld [vmem:[#allocation10 + $0x1c0] sm:$0xff]
    %v323 = vld [vmem:[#allocation10 + $0x1c8] sm:$0xff]
    %v324 = vld [vmem:[#allocation10 + $0x1d0] sm:$0xff]
    %v325 = vld [vmem:[#allocation10 + $0x1d8] sm:$0xff]
    %v326 = vld [vmem:[#allocation10 + $0x1e0] sm:$0xff]
    %v327 = vld [vmem:[#allocation10 + $0x1e8] sm:$0xff]
    %v328 = vld [vmem:[#allocation10 + $0x1f0] sm:$0xff]
    %v329 = vld [vmem:[#allocation10 + $0x1f8] sm:$0xff]
    %v330 = vld [vmem:[%s6] sm:$0xf]
    %v332 = vlaneseq
    %v333 = vshrl.u32 %v332, 7
    %v334 = vsub.s32 0, %v333
    %v335 = vrot.slane %v330, %v334
    %v336 = vlaneseq
    %v337 = vshrl.u32 %v336, 7
    %v338 = vsub.s32 1, %v337
    %v339 = vrot.slane %v330, %v338
    %v340 = vlaneseq
    %v341 = vshrl.u32 %v340, 7
    %v342 = vsub.s32 2, %v341
    %v343 = vrot.slane %v330, %v342
    %v344 = vlaneseq
    %v345 = vshrl.u32 %v344, 7
    %v346 = vsub.s32 3, %v345
    %v347 = vrot.slane %v330, %v346
    %v416 = vunpack.c.l.b16 %v266
    %v417 = vunpack.c.h.b16 %v266
    %v418 = vunpack.c.l.b16 %v267
    %v419 = vunpack.c.h.b16 %v267
    %v420 = vunpack.c.l.b16 %v268
    %v421 = vunpack.c.h.b16 %v268
    %v422 = vunpack.c.l.b16 %v269
    %v423 = vunpack.c.h.b16 %v269
    %v424 = vunpack.c.l.b16 %v270
    %v425 = vunpack.c.h.b16 %v270
    %v426 = vunpack.c.l.b16 %v271
    %v427 = vunpack.c.h.b16 %v271
    %v428 = vunpack.c.l.b16 %v272
    %v429 = vunpack.c.h.b16 %v272
    %v430 = vunpack.c.l.b16 %v273
    %v431 = vunpack.c.h.b16 %v273
    %v432 = vunpack.c.l.b16 %v274
    %v433 = vunpack.c.h.b16 %v274
    %v434 = vunpack.c.l.b16 %v275
    %v435 = vunpack.c.h.b16 %v275
    %v436 = vunpack.c.l.b16 %v276
    %v437 = vunpack.c.h.b16 %v276
    %v438 = vunpack.c.l.b16 %v277
    %v439 = vunpack.c.h.b16 %v277
    %v440 = vunpack.c.l.b16 %v278
    %v441 = vunpack.c.h.b16 %v278
    %v442 = vunpack.c.l.b16 %v279
    %v443 = vunpack.c.h.b16 %v279
    %v444 = vunpack.c.l.b16 %v280
    %v445 = vunpack.c.h.b16 %v280
    %v446 = vunpack.c.l.b16 %v281
    %v447 = vunpack.c.h.b16 %v281
    %v448 = vunpack.c.l.b16 %v282
    %v449 = vunpack.c.h.b16 %v282
    %v450 = vunpack.c.l.b16 %v283
    %v451 = vunpack.c.h.b16 %v283
    %v452 = vunpack.c.l.b16 %v284
    %v453 = vunpack.c.h.b16 %v284
    %v454 = vunpack.c.l.b16 %v285
    %v455 = vunpack.c.h.b16 %v285
    %v456 = vunpack.c.l.b16 %v286
    %v457 = vunpack.c.h.b16 %v286
    %v458 = vunpack.c.l.b16 %v287
    %v459 = vunpack.c.h.b16 %v287
    %v460 = vunpack.c.l.b16 %v288
    %v461 = vunpack.c.h.b16 %v288
    %v462 = vunpack.c.l.b16 %v289
    %v463 = vunpack.c.h.b16 %v289
    %v464 = vunpack.c.l.b16 %v290
    %v465 = vunpack.c.h.b16 %v290
    %v466 = vunpack.c.l.b16 %v291
    %v467 = vunpack.c.h.b16 %v291
    %v468 = vunpack.c.l.b16 %v292
    %v469 = vunpack.c.h.b16 %v292
    %v470 = vunpack.c.l.b16 %v293
    %v471 = vunpack.c.h.b16 %v293
    %v472 = vunpack.c.l.b16 %v294
    %v473 = vunpack.c.h.b16 %v294
    %v474 = vunpack.c.l.b16 %v295
    %v475 = vunpack.c.h.b16 %v295
    %v476 = vunpack.c.l.b16 %v296
    %v477 = vunpack.c.h.b16 %v296
    %v478 = vunpack.c.l.b16 %v297
    %v479 = vunpack.c.h.b16 %v297
    %v480 = vunpack.c.l.b16 %v298
    %v481 = vunpack.c.h.b16 %v298
    %v482 = vunpack.c.l.b16 %v299
    %v483 = vunpack.c.h.b16 %v299
    %v484 = vunpack.c.l.b16 %v300
    %v485 = vunpack.c.h.b16 %v300
    %v486 = vunpack.c.l.b16 %v301
    %v487 = vunpack.c.h.b16 %v301
    %v488 = vunpack.c.l.b16 %v302
    %v489 = vunpack.c.h.b16 %v302
    %v490 = vunpack.c.l.b16 %v303
    %v491 = vunpack.c.h.b16 %v303
    %v492 = vunpack.c.l.b16 %v304
    %v493 = vunpack.c.h.b16 %v304
    %v494 = vunpack.c.l.b16 %v305
    %v495 = vunpack.c.h.b16 %v305
    %v496 = vunpack.c.l.b16 %v306
    %v497 = vunpack.c.h.b16 %v306
    %v498 = vunpack.c.l.b16 %v307
    %v499 = vunpack.c.h.b16 %v307
    %v500 = vunpack.c.l.b16 %v308
    %v501 = vunpack.c.h.b16 %v308
    %v502 = vunpack.c.l.b16 %v309
    %v503 = vunpack.c.h.b16 %v309
    %v504 = vunpack.c.l.b16 %v310
    %v505 = vunpack.c.h.b16 %v310
    %v506 = vunpack.c.l.b16 %v311
    %v507 = vunpack.c.h.b16 %v311
    %v508 = vunpack.c.l.b16 %v312
    %v509 = vunpack.c.h.b16 %v312
    %v510 = vunpack.c.l.b16 %v313
    %v511 = vunpack.c.h.b16 %v313
    %v512 = vunpack.c.l.b16 %v314
    %v513 = vunpack.c.h.b16 %v314
    %v514 = vunpack.c.l.b16 %v315
    %v515 = vunpack.c.h.b16 %v315
    %v516 = vunpack.c.l.b16 %v316
    %v517 = vunpack.c.h.b16 %v316
    %v518 = vunpack.c.l.b16 %v317
    %v519 = vunpack.c.h.b16 %v317
    %v520 = vunpack.c.l.b16 %v318
    %v521 = vunpack.c.h.b16 %v318
    %v522 = vunpack.c.l.b16 %v319
    %v523 = vunpack.c.h.b16 %v319
    %v524 = vunpack.c.l.b16 %v320
    %v525 = vunpack.c.h.b16 %v320
    %v526 = vunpack.c.l.b16 %v321
    %v527 = vunpack.c.h.b16 %v321
    %v528 = vunpack.c.l.b16 %v322
    %v529 = vunpack.c.h.b16 %v322
    %v530 = vunpack.c.l.b16 %v323
    %v531 = vunpack.c.h.b16 %v323
    %v532 = vunpack.c.l.b16 %v324
    %v533 = vunpack.c.h.b16 %v324
    %v534 = vunpack.c.l.b16 %v325
    %v535 = vunpack.c.h.b16 %v325
    %v536 = vunpack.c.l.b16 %v326
    %v537 = vunpack.c.h.b16 %v326
    %v538 = vunpack.c.l.b16 %v327
    %v539 = vunpack.c.h.b16 %v327
    %v540 = vunpack.c.l.b16 %v328
    %v541 = vunpack.c.h.b16 %v328
    %v542 = vunpack.c.l.b16 %v329
    %v543 = vunpack.c.h.b16 %v329
    %v544 = vpack.c.b16 %v420, %v416
    %v545 = vpack.c.b16 %v421, %v417
    %v546 = vpack.c.b16 %v422, %v418
    %v547 = vpack.c.b16 %v423, %v419
    %v548 = vpack.c.b16 %v428, %v424
    %v549 = vpack.c.b16 %v429, %v425
    %v550 = vpack.c.b16 %v430, %v426
    %v551 = vpack.c.b16 %v431, %v427
    %v552 = vpack.c.b16 %v436, %v432
    %v553 = vpack.c.b16 %v437, %v433
    %v554 = vpack.c.b16 %v438, %v434
    %v555 = vpack.c.b16 %v439, %v435
    %v556 = vpack.c.b16 %v444, %v440
    %v557 = vpack.c.b16 %v445, %v441
    %v558 = vpack.c.b16 %v446, %v442
    %v559 = vpack.c.b16 %v447, %v443
    %v560 = vpack.c.b16 %v452, %v448
    %v561 = vpack.c.b16 %v453, %v449
    %v562 = vpack.c.b16 %v454, %v450
    %v563 = vpack.c.b16 %v455, %v451
    %v564 = vpack.c.b16 %v460, %v456
    %v565 = vpack.c.b16 %v461, %v457
    %v566 = vpack.c.b16 %v462, %v458
    %v567 = vpack.c.b16 %v463, %v459
    %v568 = vpack.c.b16 %v468, %v464
    %v569 = vpack.c.b16 %v469, %v465
    %v570 = vpack.c.b16 %v470, %v466
    %v571 = vpack.c.b16 %v471, %v467
    %v572 = vpack.c.b16 %v476, %v472
    %v573 = vpack.c.b16 %v477, %v473
    %v574 = vpack.c.b16 %v478, %v474
    %v575 = vpack.c.b16 %v479, %v475
    %v576 = vpack.c.b16 %v484, %v480
    %v577 = vpack.c.b16 %v485, %v481
    %v578 = vpack.c.b16 %v486, %v482
    %v579 = vpack.c.b16 %v487, %v483
    %v580 = vpack.c.b16 %v492, %v488
    %v581 = vpack.c.b16 %v493, %v489
    %v582 = vpack.c.b16 %v494, %v490
    %v583 = vpack.c.b16 %v495, %v491
    %v584 = vpack.c.b16 %v500, %v496
    %v585 = vpack.c.b16 %v501, %v497
    %v586 = vpack.c.b16 %v502, %v498
    %v587 = vpack.c.b16 %v503, %v499
    %v588 = vpack.c.b16 %v508, %v504
    %v589 = vpack.c.b16 %v509, %v505
    %v590 = vpack.c.b16 %v510, %v506
    %v591 = vpack.c.b16 %v511, %v507
    %v592 = vpack.c.b16 %v516, %v512
    %v593 = vpack.c.b16 %v517, %v513
    %v594 = vpack.c.b16 %v518, %v514
    %v595 = vpack.c.b16 %v519, %v515
    %v596 = vpack.c.b16 %v524, %v520
    %v597 = vpack.c.b16 %v525, %v521
    %v598 = vpack.c.b16 %v526, %v522
    %v599 = vpack.c.b16 %v527, %v523
    %v600 = vpack.c.b16 %v532, %v528
    %v601 = vpack.c.b16 %v533, %v529
    %v602 = vpack.c.b16 %v534, %v530
    %v603 = vpack.c.b16 %v535, %v531
    %v604 = vpack.c.b16 %v540, %v536
    %v605 = vpack.c.b16 %v541, %v537
    %v606 = vpack.c.b16 %v542, %v538
    %v607 = vpack.c.b16 %v543, %v539
    %672 = vmatprep.subr.bf16.mxu0 %v573
    %673 = vmatpush1.bf16.msra.mxu0 %v572
    %674 = vmatprep.subr.bf16.mxu0 %v569
    %675 = vmatpush1.bf16.msra.mxu0 %v568
    %676 = vmatprep.subr.bf16.mxu0 %v565
    %677 = vmatpush1.bf16.msra.mxu0 %v564
    %678 = vmatprep.subr.bf16.mxu0 %v561
    %679 = vmatpush1.bf16.msra.mxu0 %v560
    %680 = vmatprep.subr.bf16.mxu0 %v557
    %681 = vmatpush1.bf16.msra.mxu0 %v556
    %682 = vmatprep.subr.bf16.mxu0 %v553
    %683 = vmatpush1.bf16.msra.mxu0 %v552
    %684 = vmatprep.subr.bf16.mxu0 %v549
    %685 = vmatpush1.bf16.msra.mxu0 %v548
    %686 = vmatprep.subr.bf16.mxu0 %v545
    %687 = vmatpush1.bf16.msra.mxu0 %v544
    %688 = vmatprep.subr.bf16.mxu0 %v605
    %689 = vmatpush2.bf16.msra.mxu0 %v604
    %690 = vmatprep.subr.bf16.mxu0 %v601
    %691 = vmatpush2.bf16.msra.mxu0 %v600
    %692 = vmatprep.subr.bf16.mxu0 %v597
    %693 = vmatpush2.bf16.msra.mxu0 %v596
    %694 = vmatprep.subr.bf16.mxu0 %v593
    %695 = vmatpush2.bf16.msra.mxu0 %v592
    %696 = vmatprep.subr.bf16.mxu0 %v589
    %697 = vmatpush2.bf16.msra.mxu0 %v588
    %698 = vmatprep.subr.bf16.mxu0 %v585
    %699 = vmatpush2.bf16.msra.mxu0 %v584
    %700 = vmatprep.subr.bf16.mxu0 %v581
    %701 = vmatpush2.bf16.msra.mxu0 %v580
    %702 = vmatprep.subr.bf16.mxu0 %v577
    %703 = vmatpush2.bf16.msra.mxu0 %v576
    %704 = vmatprep.mubr.bf16.mxu0 %v265
    %705 = vmatmul.mubr.bf16.gmra.mxu0 %v264
    %v706 = vpop.f32.mrf.mxu0
    %v707 = vadd.f32 %v335, %v706
    %v708 = vpop.f32.mrf.mxu0
    %v709 = vadd.f32 %v339, %v708
    %v710 = vpop.f32.mrf.mxu0
    %v711 = vpop.f32.mrf.mxu0
    %712 = vdwg.mxu0
    %713 = vmatprep.subr.bf16.mxu0 %v575
    %714 = vmatpush1.bf16.msra.mxu0 %v574
    %715 = vmatprep.subr.bf16.mxu0 %v571
    %716 = vmatpush1.bf16.msra.mxu0 %v570
    %717 = vmatprep.subr.bf16.mxu0 %v567
    %718 = vmatpush1.bf16.msra.mxu0 %v566
    %719 = vmatprep.subr.bf16.mxu0 %v563
    %720 = vmatpush1.bf16.msra.mxu0 %v562
    %721 = vmatprep.subr.bf16.mxu0 %v559
    %722 = vmatpush1.bf16.msra.mxu0 %v558
    %723 = vmatprep.subr.bf16.mxu0 %v555
    %724 = vmatpush1.bf16.msra.mxu0 %v554
    %725 = vmatprep.subr.bf16.mxu0 %v551
    %726 = vmatpush1.bf16.msra.mxu0 %v550
    %727 = vmatprep.subr.bf16.mxu0 %v547
    %728 = vmatpush1.bf16.msra.mxu0 %v546
    %729 = vmatprep.subr.bf16.mxu0 %v607
    %730 = vmatpush2.bf16.msra.mxu0 %v606
    %731 = vmatprep.subr.bf16.mxu0 %v603
    %732 = vmatpush2.bf16.msra.mxu0 %v602
    %733 = vmatprep.subr.bf16.mxu0 %v599
    %734 = vmatpush2.bf16.msra.mxu0 %v598
    %735 = vmatprep.subr.bf16.mxu0 %v595
    %736 = vmatpush2.bf16.msra.mxu0 %v594
    %737 = vmatprep.subr.bf16.mxu0 %v591
    %738 = vmatpush2.bf16.msra.mxu0 %v590
    %739 = vmatprep.subr.bf16.mxu0 %v587
    %740 = vmatpush2.bf16.msra.mxu0 %v586
    %741 = vmatprep.subr.bf16.mxu0 %v583
    %742 = vmatpush2.bf16.msra.mxu0 %v582
    %743 = vmatprep.subr.bf16.mxu0 %v579
    %744 = vmatpush2.bf16.msra.mxu0 %v578
    %745 = vmatprep.mubr.bf16.mxu0 %v265
    %746 = vmatmul.mubr.bf16.gmra.mxu0 %v264
    %v747 = vpop.f32.mrf.mxu0
    %v748 = vadd.f32 %v343, %v747
    %v749 = vpop.f32.mrf.mxu0
    %v750 = vadd.f32 %v347, %v749
    %v751 = vpop.f32.mrf.mxu0
    %v752 = vpop.f32.mrf.mxu0
    %753 = vdwg.mxu0
    %v754 = vpack.c.bf16 %v707, %v707
    %v755 = vpack.c.bf16 %v709, %v709
    %v756 = vpack.c.bf16 %v748, %v748
    %v757 = vpack.c.bf16 %v750, %v750
    %v758 = vmax.bf16 %v754, 0
    %v759 = vmax.bf16 %v755, 0
    %v760 = vmax.bf16 %v756, 0
    %v761 = vmax.bf16 %v757, 0
    %v762 = vld [vmem:[#allocation11] sm:$0xff]
    %v763 = vld [vmem:[#allocation11 + $0x8] sm:$0xff]
    %v764 = vld [vmem:[#allocation11 + $0x10] sm:$0xff]
    %v765 = vld [vmem:[#allocation11 + $0x18] sm:$0xff]
    %v766 = vld [vmem:[#allocation11 + $0x20] sm:$0xff]
    %v767 = vld [vmem:[#allocation11 + $0x28] sm:$0xff]
    %v768 = vld [vmem:[#allocation11 + $0x30] sm:$0xff]
    %v769 = vld [vmem:[#allocation11 + $0x38] sm:$0xff]
    %v770 = vld [vmem:[#allocation11 + $0x40] sm:$0xff]
    %v771 = vld [vmem:[#allocation11 + $0x48] sm:$0xff]
    %v772 = vld [vmem:[#allocation11 + $0x50] sm:$0xff]
    %v773 = vld [vmem:[#allocation11 + $0x58] sm:$0xff]
    %v774 = vld [vmem:[#allocation11 + $0x60] sm:$0xff]
    %v775 = vld [vmem:[#allocation11 + $0x68] sm:$0xff]
    %v776 = vld [vmem:[#allocation11 + $0x70] sm:$0xff]
    %v777 = vld [vmem:[#allocation11 + $0x78] sm:$0xff]
    %v778 = vld [vmem:[#allocation11 + $0x80] sm:$0xff]
    %v779 = vld [vmem:[#allocation11 + $0x88] sm:$0xff]
    %v780 = vld [vmem:[#allocation11 + $0x90] sm:$0xff]
    %v781 = vld [vmem:[#allocation11 + $0x98] sm:$0xff]
    %v782 = vld [vmem:[#allocation11 + $0xa0] sm:$0xff]
    %v783 = vld [vmem:[#allocation11 + $0xa8] sm:$0xff]
    %v784 = vld [vmem:[#allocation11 + $0xb0] sm:$0xff]
    %v785 = vld [vmem:[#allocation11 + $0xb8] sm:$0xff]
    %v786 = vld [vmem:[#allocation11 + $0xc0] sm:$0xff]
    %v787 = vld [vmem:[#allocation11 + $0xc8] sm:$0xff]
    %v788 = vld [vmem:[#allocation11 + $0xd0] sm:$0xff]
    %v789 = vld [vmem:[#allocation11 + $0xd8] sm:$0xff]
    %v790 = vld [vmem:[#allocation11 + $0xe0] sm:$0xff]
    %v791 = vld [vmem:[#allocation11 + $0xe8] sm:$0xff]
    %v792 = vld [vmem:[#allocation11 + $0xf0] sm:$0xff]
    %v793 = vld [vmem:[#allocation11 + $0xf8] sm:$0xff]
    %v794 = vld [vmem:[#allocation11 + $0x100] sm:$0xff]
    %v795 = vld [vmem:[#allocation11 + $0x108] sm:$0xff]
    %v796 = vld [vmem:[#allocation11 + $0x110] sm:$0xff]
    %v797 = vld [vmem:[#allocation11 + $0x118] sm:$0xff]
    %v798 = vld [vmem:[#allocation11 + $0x120] sm:$0xff]
    %v799 = vld [vmem:[#allocation11 + $0x128] sm:$0xff]
    %v800 = vld [vmem:[#allocation11 + $0x130] sm:$0xff]
    %v801 = vld [vmem:[#allocation11 + $0x138] sm:$0xff]
    %v802 = vld [vmem:[#allocation11 + $0x140] sm:$0xff]
    %v803 = vld [vmem:[#allocation11 + $0x148] sm:$0xff]
    %v804 = vld [vmem:[#allocation11 + $0x150] sm:$0xff]
    %v805 = vld [vmem:[#allocation11 + $0x158] sm:$0xff]
    %v806 = vld [vmem:[#allocation11 + $0x160] sm:$0xff]
    %v807 = vld [vmem:[#allocation11 + $0x168] sm:$0xff]
    %v808 = vld [vmem:[#allocation11 + $0x170] sm:$0xff]
    %v809 = vld [vmem:[#allocation11 + $0x178] sm:$0xff]
    %v810 = vld [vmem:[#allocation11 + $0x180] sm:$0xff]
    %v811 = vld [vmem:[#allocation11 + $0x188] sm:$0xff]
    %v812 = vld [vmem:[#allocation11 + $0x190] sm:$0xff]
    %v813 = vld [vmem:[#allocation11 + $0x198] sm:$0xff]
    %v814 = vld [vmem:[#allocation11 + $0x1a0] sm:$0xff]
    %v815 = vld [vmem:[#allocation11 + $0x1a8] sm:$0xff]
    %v816 = vld [vmem:[#allocation11 + $0x1b0] sm:$0xff]
    %v817 = vld [vmem:[#allocation11 + $0x1b8] sm:$0xff]
    %v818 = vld [vmem:[#allocation11 + $0x1c0] sm:$0xff]
    %v819 = vld [vmem:[#allocation11 + $0x1c8] sm:$0xff]
    %v820 = vld [vmem:[#allocation11 + $0x1d0] sm:$0xff]
    %v821 = vld [vmem:[#allocation11 + $0x1d8] sm:$0xff]
    %v822 = vld [vmem:[#allocation11 + $0x1e0] sm:$0xff]
    %v823 = vld [vmem:[#allocation11 + $0x1e8] sm:$0xff]
    %v824 = vld [vmem:[#allocation11 + $0x1f0] sm:$0xff]
    %v825 = vld [vmem:[#allocation11 + $0x1f8] sm:$0xff]
    %v826 = vld [vmem:[#allocation11 + $0x200] sm:$0xff]
    %v827 = vld [vmem:[#allocation11 + $0x208] sm:$0xff]
    %v828 = vld [vmem:[#allocation11 + $0x210] sm:$0xff]
    %v829 = vld [vmem:[#allocation11 + $0x218] sm:$0xff]
    %v830 = vld [vmem:[#allocation11 + $0x220] sm:$0xff]
    %v831 = vld [vmem:[#allocation11 + $0x228] sm:$0xff]
    %v832 = vld [vmem:[#allocation11 + $0x230] sm:$0xff]
    %v833 = vld [vmem:[#allocation11 + $0x238] sm:$0xff]
    %v834 = vld [vmem:[#allocation11 + $0x240] sm:$0xff]
    %v835 = vld [vmem:[#allocation11 + $0x248] sm:$0xff]
    %v836 = vld [vmem:[#allocation11 + $0x250] sm:$0xff]
    %v837 = vld [vmem:[#allocation11 + $0x258] sm:$0xff]
    %v838 = vld [vmem:[#allocation11 + $0x260] sm:$0xff]
    %v839 = vld [vmem:[#allocation11 + $0x268] sm:$0xff]
    %v840 = vld [vmem:[#allocation11 + $0x270] sm:$0xff]
    %v841 = vld [vmem:[#allocation11 + $0x278] sm:$0xff]
    %v842 = vld [vmem:[#allocation11 + $0x280] sm:$0xff]
    %v843 = vld [vmem:[#allocation11 + $0x288] sm:$0xff]
    %v844 = vld [vmem:[#allocation11 + $0x290] sm:$0xff]
    %v845 = vld [vmem:[#allocation11 + $0x298] sm:$0xff]
    %v846 = vld [vmem:[#allocation11 + $0x2a0] sm:$0xff]
    %v847 = vld [vmem:[#allocation11 + $0x2a8] sm:$0xff]
    %v848 = vld [vmem:[#allocation11 + $0x2b0] sm:$0xff]
    %v849 = vld [vmem:[#allocation11 + $0x2b8] sm:$0xff]
    %v850 = vld [vmem:[#allocation11 + $0x2c0] sm:$0xff]
    %v851 = vld [vmem:[#allocation11 + $0x2c8] sm:$0xff]
    %v852 = vld [vmem:[#allocation11 + $0x2d0] sm:$0xff]
    %v853 = vld [vmem:[#allocation11 + $0x2d8] sm:$0xff]
    %v854 = vld [vmem:[#allocation11 + $0x2e0] sm:$0xff]
    %v855 = vld [vmem:[#allocation11 + $0x2e8] sm:$0xff]
    %v856 = vld [vmem:[#allocation11 + $0x2f0] sm:$0xff]
    %v857 = vld [vmem:[#allocation11 + $0x2f8] sm:$0xff]
    %v858 = vld [vmem:[#allocation11 + $0x300] sm:$0xff]
    %v859 = vld [vmem:[#allocation11 + $0x308] sm:$0xff]
    %v860 = vld [vmem:[#allocation11 + $0x310] sm:$0xff]
    %v861 = vld [vmem:[#allocation11 + $0x318] sm:$0xff]
    %v862 = vld [vmem:[#allocation11 + $0x320] sm:$0xff]
    %v863 = vld [vmem:[#allocation11 + $0x328] sm:$0xff]
    %v864 = vld [vmem:[#allocation11 + $0x330] sm:$0xff]
    %v865 = vld [vmem:[#allocation11 + $0x338] sm:$0xff]
    %v866 = vld [vmem:[#allocation11 + $0x340] sm:$0xff]
    %v867 = vld [vmem:[#allocation11 + $0x348] sm:$0xff]
    %v868 = vld [vmem:[#allocation11 + $0x350] sm:$0xff]
    %v869 = vld [vmem:[#allocation11 + $0x358] sm:$0xff]
    %v870 = vld [vmem:[#allocation11 + $0x360] sm:$0xff]
    %v871 = vld [vmem:[#allocation11 + $0x368] sm:$0xff]
    %v872 = vld [vmem:[#allocation11 + $0x370] sm:$0xff]
    %v873 = vld [vmem:[#allocation11 + $0x378] sm:$0xff]
    %v874 = vld [vmem:[#allocation11 + $0x380] sm:$0xff]
    %v875 = vld [vmem:[#allocation11 + $0x388] sm:$0xff]
    %v876 = vld [vmem:[#allocation11 + $0x390] sm:$0xff]
    %v877 = vld [vmem:[#allocation11 + $0x398] sm:$0xff]
    %v878 = vld [vmem:[#allocation11 + $0x3a0] sm:$0xff]
    %v879 = vld [vmem:[#allocation11 + $0x3a8] sm:$0xff]
    %v880 = vld [vmem:[#allocation11 + $0x3b0] sm:$0xff]
    %v881 = vld [vmem:[#allocation11 + $0x3b8] sm:$0xff]
    %v882 = vld [vmem:[#allocation11 + $0x3c0] sm:$0xff]
    %v883 = vld [vmem:[#allocation11 + $0x3c8] sm:$0xff]
    %v884 = vld [vmem:[#allocation11 + $0x3d0] sm:$0xff]
    %v885 = vld [vmem:[#allocation11 + $0x3d8] sm:$0xff]
    %v886 = vld [vmem:[#allocation11 + $0x3e0] sm:$0xff]
    %v887 = vld [vmem:[#allocation11 + $0x3e8] sm:$0xff]
    %v888 = vld [vmem:[#allocation11 + $0x3f0] sm:$0xff]
    %v889 = vld [vmem:[#allocation11 + $0x3f8] sm:$0xff]
    %v890 = vld [vmem:[#allocation11 + $0x400] sm:$0xff]
    %v891 = vld [vmem:[#allocation11 + $0x408] sm:$0xff]
    %v892 = vld [vmem:[#allocation11 + $0x410] sm:$0xff]
    %v893 = vld [vmem:[#allocation11 + $0x418] sm:$0xff]
    %v894 = vld [vmem:[#allocation11 + $0x420] sm:$0xff]
    %v895 = vld [vmem:[#allocation11 + $0x428] sm:$0xff]
    %v896 = vld [vmem:[#allocation11 + $0x430] sm:$0xff]
    %v897 = vld [vmem:[#allocation11 + $0x438] sm:$0xff]
    %v898 = vld [vmem:[#allocation11 + $0x440] sm:$0xff]
    %v899 = vld [vmem:[#allocation11 + $0x448] sm:$0xff]
    %v900 = vld [vmem:[#allocation11 + $0x450] sm:$0xff]
    %v901 = vld [vmem:[#allocation11 + $0x458] sm:$0xff]
    %v902 = vld [vmem:[#allocation11 + $0x460] sm:$0xff]
    %v903 = vld [vmem:[#allocation11 + $0x468] sm:$0xff]
    %v904 = vld [vmem:[#allocation11 + $0x470] sm:$0xff]
    %v905 = vld [vmem:[#allocation11 + $0x478] sm:$0xff]
    %v906 = vld [vmem:[#allocation11 + $0x480] sm:$0xff]
    %v907 = vld [vmem:[#allocation11 + $0x488] sm:$0xff]
    %v908 = vld [vmem:[#allocation11 + $0x490] sm:$0xff]
    %v909 = vld [vmem:[#allocation11 + $0x498] sm:$0xff]
    %v910 = vld [vmem:[#allocation11 + $0x4a0] sm:$0xff]
    %v911 = vld [vmem:[#allocation11 + $0x4a8] sm:$0xff]
    %v912 = vld [vmem:[#allocation11 + $0x4b0] sm:$0xff]
    %v913 = vld [vmem:[#allocation11 + $0x4b8] sm:$0xff]
    %v914 = vld [vmem:[#allocation11 + $0x4c0] sm:$0xff]
    %v915 = vld [vmem:[#allocation11 + $0x4c8] sm:$0xff]
    %v916 = vld [vmem:[#allocation11 + $0x4d0] sm:$0xff]
    %v917 = vld [vmem:[#allocation11 + $0x4d8] sm:$0xff]
    %v918 = vld [vmem:[#allocation11 + $0x4e0] sm:$0xff]
    %v919 = vld [vmem:[#allocation11 + $0x4e8] sm:$0xff]
    %v920 = vld [vmem:[#allocation11 + $0x4f0] sm:$0xff]
    %v921 = vld [vmem:[#allocation11 + $0x4f8] sm:$0xff]
    %v922 = vld [vmem:[#allocation11 + $0x500] sm:$0xff]
    %v923 = vld [vmem:[#allocation11 + $0x508] sm:$0xff]
    %v924 = vld [vmem:[#allocation11 + $0x510] sm:$0xff]
    %v925 = vld [vmem:[#allocation11 + $0x518] sm:$0xff]
    %v926 = vld [vmem:[#allocation11 + $0x520] sm:$0xff]
    %v927 = vld [vmem:[#allocation11 + $0x528] sm:$0xff]
    %v928 = vld [vmem:[#allocation11 + $0x530] sm:$0xff]
    %v929 = vld [vmem:[#allocation11 + $0x538] sm:$0xff]
    %v930 = vld [vmem:[#allocation11 + $0x540] sm:$0xff]
    %v931 = vld [vmem:[#allocation11 + $0x548] sm:$0xff]
    %v932 = vld [vmem:[#allocation11 + $0x550] sm:$0xff]
    %v933 = vld [vmem:[#allocation11 + $0x558] sm:$0xff]
    %v934 = vld [vmem:[#allocation11 + $0x560] sm:$0xff]
    %v935 = vld [vmem:[#allocation11 + $0x568] sm:$0xff]
    %v936 = vld [vmem:[#allocation11 + $0x570] sm:$0xff]
    %v937 = vld [vmem:[#allocation11 + $0x578] sm:$0xff]
    %v938 = vld [vmem:[#allocation11 + $0x580] sm:$0xff]
    %v939 = vld [vmem:[#allocation11 + $0x588] sm:$0xff]
    %v940 = vld [vmem:[#allocation11 + $0x590] sm:$0xff]
    %v941 = vld [vmem:[#allocation11 + $0x598] sm:$0xff]
    %v942 = vld [vmem:[#allocation11 + $0x5a0] sm:$0xff]
    %v943 = vld [vmem:[#allocation11 + $0x5a8] sm:$0xff]
    %v944 = vld [vmem:[#allocation11 + $0x5b0] sm:$0xff]
    %v945 = vld [vmem:[#allocation11 + $0x5b8] sm:$0xff]
    %v946 = vld [vmem:[#allocation11 + $0x5c0] sm:$0xff]
    %v947 = vld [vmem:[#allocation11 + $0x5c8] sm:$0xff]
    %v948 = vld [vmem:[#allocation11 + $0x5d0] sm:$0xff]
    %v949 = vld [vmem:[#allocation11 + $0x5d8] sm:$0xff]
    %v950 = vld [vmem:[#allocation11 + $0x5e0] sm:$0xff]
    %v951 = vld [vmem:[#allocation11 + $0x5e8] sm:$0xff]
    %v952 = vld [vmem:[#allocation11 + $0x5f0] sm:$0xff]
    %v953 = vld [vmem:[#allocation11 + $0x5f8] sm:$0xff]
    %v954 = vld [vmem:[#allocation11 + $0x600] sm:$0xff]
    %v955 = vld [vmem:[#allocation11 + $0x608] sm:$0xff]
    %v956 = vld [vmem:[#allocation11 + $0x610] sm:$0xff]
    %v957 = vld [vmem:[#allocation11 + $0x618] sm:$0xff]
    %v958 = vld [vmem:[#allocation11 + $0x620] sm:$0xff]
    %v959 = vld [vmem:[#allocation11 + $0x628] sm:$0xff]
    %v960 = vld [vmem:[#allocation11 + $0x630] sm:$0xff]
    %v961 = vld [vmem:[#allocation11 + $0x638] sm:$0xff]
    %v962 = vld [vmem:[#allocation11 + $0x640] sm:$0xff]
    %v963 = vld [vmem:[#allocation11 + $0x648] sm:$0xff]
    %v964 = vld [vmem:[#allocation11 + $0x650] sm:$0xff]
    %v965 = vld [vmem:[#allocation11 + $0x658] sm:$0xff]
    %v966 = vld [vmem:[#allocation11 + $0x660] sm:$0xff]
    %v967 = vld [vmem:[#allocation11 + $0x668] sm:$0xff]
    %v968 = vld [vmem:[#allocation11 + $0x670] sm:$0xff]
    %v969 = vld [vmem:[#allocation11 + $0x678] sm:$0xff]
    %v970 = vld [vmem:[#allocation11 + $0x680] sm:$0xff]
    %v971 = vld [vmem:[#allocation11 + $0x688] sm:$0xff]
    %v972 = vld [vmem:[#allocation11 + $0x690] sm:$0xff]
    %v973 = vld [vmem:[#allocation11 + $0x698] sm:$0xff]
    %v974 = vld [vmem:[#allocation11 + $0x6a0] sm:$0xff]
    %v975 = vld [vmem:[#allocation11 + $0x6a8] sm:$0xff]
    %v976 = vld [vmem:[#allocation11 + $0x6b0] sm:$0xff]
    %v977 = vld [vmem:[#allocation11 + $0x6b8] sm:$0xff]
    %v978 = vld [vmem:[#allocation11 + $0x6c0] sm:$0xff]
    %v979 = vld [vmem:[#allocation11 + $0x6c8] sm:$0xff]
    %v980 = vld [vmem:[#allocation11 + $0x6d0] sm:$0xff]
    %v981 = vld [vmem:[#allocation11 + $0x6d8] sm:$0xff]
    %v982 = vld [vmem:[#allocation11 + $0x6e0] sm:$0xff]
    %v983 = vld [vmem:[#allocation11 + $0x6e8] sm:$0xff]
    %v984 = vld [vmem:[#allocation11 + $0x6f0] sm:$0xff]
    %v985 = vld [vmem:[#allocation11 + $0x6f8] sm:$0xff]
    %v986 = vld [vmem:[#allocation11 + $0x700] sm:$0xff]
    %v987 = vld [vmem:[#allocation11 + $0x708] sm:$0xff]
    %v988 = vld [vmem:[#allocation11 + $0x710] sm:$0xff]
    %v989 = vld [vmem:[#allocation11 + $0x718] sm:$0xff]
    %v990 = vld [vmem:[#allocation11 + $0x720] sm:$0xff]
    %v991 = vld [vmem:[#allocation11 + $0x728] sm:$0xff]
    %v992 = vld [vmem:[#allocation11 + $0x730] sm:$0xff]
    %v993 = vld [vmem:[#allocation11 + $0x738] sm:$0xff]
    %v994 = vld [vmem:[#allocation11 + $0x740] sm:$0xff]
    %v995 = vld [vmem:[#allocation11 + $0x748] sm:$0xff]
    %v996 = vld [vmem:[#allocation11 + $0x750] sm:$0xff]
    %v997 = vld [vmem:[#allocation11 + $0x758] sm:$0xff]
    %v998 = vld [vmem:[#allocation11 + $0x760] sm:$0xff]
    %v999 = vld [vmem:[#allocation11 + $0x768] sm:$0xff]
    %v1000 = vld [vmem:[#allocation11 + $0x770] sm:$0xff]
    %v1001 = vld [vmem:[#allocation11 + $0x778] sm:$0xff]
    %v1002 = vld [vmem:[#allocation11 + $0x780] sm:$0xff]
    %v1003 = vld [vmem:[#allocation11 + $0x788] sm:$0xff]
    %v1004 = vld [vmem:[#allocation11 + $0x790] sm:$0xff]
    %v1005 = vld [vmem:[#allocation11 + $0x798] sm:$0xff]
    %v1006 = vld [vmem:[#allocation11 + $0x7a0] sm:$0xff]
    %v1007 = vld [vmem:[#allocation11 + $0x7a8] sm:$0xff]
    %v1008 = vld [vmem:[#allocation11 + $0x7b0] sm:$0xff]
    %v1009 = vld [vmem:[#allocation11 + $0x7b8] sm:$0xff]
    %v1010 = vld [vmem:[#allocation11 + $0x7c0] sm:$0xff]
    %v1011 = vld [vmem:[#allocation11 + $0x7c8] sm:$0xff]
    %v1012 = vld [vmem:[#allocation11 + $0x7d0] sm:$0xff]
    %v1013 = vld [vmem:[#allocation11 + $0x7d8] sm:$0xff]
    %v1014 = vld [vmem:[#allocation11 + $0x7e0] sm:$0xff]
    %v1015 = vld [vmem:[#allocation11 + $0x7e8] sm:$0xff]
    %v1016 = vld [vmem:[#allocation11 + $0x7f0] sm:$0xff]
    %v1017 = vld [vmem:[#allocation11 + $0x7f8] sm:$0xff]
    %v1018 = vld [vmem:[%s8] sm:$0xff]
    %v1020 = vlaneseq
    %v1021 = vshrl.u32 %v1020, 7
    %v1022 = vsub.s32 0, %v1021
    %v1023 = vrot.slane %v1018, %v1022
    %v1024 = vlaneseq
    %v1025 = vshrl.u32 %v1024, 7
    %v1026 = vsub.s32 1, %v1025
    %v1027 = vrot.slane %v1018, %v1026
    %v1028 = vlaneseq
    %v1029 = vshrl.u32 %v1028, 7
    %v1030 = vsub.s32 2, %v1029
    %v1031 = vrot.slane %v1018, %v1030
    %v1032 = vlaneseq
    %v1033 = vshrl.u32 %v1032, 7
    %v1034 = vsub.s32 3, %v1033
    %v1035 = vrot.slane %v1018, %v1034
    %v1036 = vlaneseq
    %v1037 = vshrl.u32 %v1036, 7
    %v1038 = vsub.s32 4, %v1037
    %v1039 = vrot.slane %v1018, %v1038
    %v1040 = vlaneseq
    %v1041 = vshrl.u32 %v1040, 7
    %v1042 = vsub.s32 5, %v1041
    %v1043 = vrot.slane %v1018, %v1042
    %v1044 = vlaneseq
    %v1045 = vshrl.u32 %v1044, 7
    %v1046 = vsub.s32 6, %v1045
    %v1047 = vrot.slane %v1018, %v1046
    %v1048 = vlaneseq
    %v1049 = vshrl.u32 %v1048, 7
    %v1050 = vsub.s32 7, %v1049
    %v1051 = vrot.slane %v1018, %v1050
    %v1316 = vunpack.c.l.b16 %v762
    %v1317 = vunpack.c.h.b16 %v762
    %v1318 = vunpack.c.l.b16 %v763
    %v1319 = vunpack.c.h.b16 %v763
    %v1320 = vunpack.c.l.b16 %v764
    %v1321 = vunpack.c.h.b16 %v764
    %v1322 = vunpack.c.l.b16 %v765
    %v1323 = vunpack.c.h.b16 %v765
    %v1324 = vunpack.c.l.b16 %v766
    %v1325 = vunpack.c.h.b16 %v766
    %v1326 = vunpack.c.l.b16 %v767
    %v1327 = vunpack.c.h.b16 %v767
    %v1328 = vunpack.c.l.b16 %v768
    %v1329 = vunpack.c.h.b16 %v768
    %v1330 = vunpack.c.l.b16 %v769
    %v1331 = vunpack.c.h.b16 %v769
    %v1332 = vunpack.c.l.b16 %v770
    %v1333 = vunpack.c.h.b16 %v770
    %v1334 = vunpack.c.l.b16 %v771
    %v1335 = vunpack.c.h.b16 %v771
    %v1336 = vunpack.c.l.b16 %v772
    %v1337 = vunpack.c.h.b16 %v772
    %v1338 = vunpack.c.l.b16 %v773
    %v1339 = vunpack.c.h.b16 %v773
    %v1340 = vunpack.c.l.b16 %v774
    %v1341 = vunpack.c.h.b16 %v774
    %v1342 = vunpack.c.l.b16 %v775
    %v1343 = vunpack.c.h.b16 %v775
    %v1344 = vunpack.c.l.b16 %v776
    %v1345 = vunpack.c.h.b16 %v776
    %v1346 = vunpack.c.l.b16 %v777
    %v1347 = vunpack.c.h.b16 %v777
    %v1348 = vunpack.c.l.b16 %v778
    %v1349 = vunpack.c.h.b16 %v778
    %v1350 = vunpack.c.l.b16 %v779
    %v1351 = vunpack.c.h.b16 %v779
    %v1352 = vunpack.c.l.b16 %v780
    %v1353 = vunpack.c.h.b16 %v780
    %v1354 = vunpack.c.l.b16 %v781
    %v1355 = vunpack.c.h.b16 %v781
    %v1356 = vunpack.c.l.b16 %v782
    %v1357 = vunpack.c.h.b16 %v782
    %v1358 = vunpack.c.l.b16 %v783
    %v1359 = vunpack.c.h.b16 %v783
    %v1360 = vunpack.c.l.b16 %v784
    %v1361 = vunpack.c.h.b16 %v784
    %v1362 = vunpack.c.l.b16 %v785
    %v1363 = vunpack.c.h.b16 %v785
    %v1364 = vunpack.c.l.b16 %v786
    %v1365 = vunpack.c.h.b16 %v786
    %v1366 = vunpack.c.l.b16 %v787
    %v1367 = vunpack.c.h.b16 %v787
    %v1368 = vunpack.c.l.b16 %v788
    %v1369 = vunpack.c.h.b16 %v788
    %v1370 = vunpack.c.l.b16 %v789
    %v1371 = vunpack.c.h.b16 %v789
    %v1372 = vunpack.c.l.b16 %v790
    %v1373 = vunpack.c.h.b16 %v790
    %v1374 = vunpack.c.l.b16 %v791
    %v1375 = vunpack.c.h.b16 %v791
    %v1376 = vunpack.c.l.b16 %v792
    %v1377 = vunpack.c.h.b16 %v792
    %v1378 = vunpack.c.l.b16 %v793
    %v1379 = vunpack.c.h.b16 %v793
    %v1380 = vunpack.c.l.b16 %v794
    %v1381 = vunpack.c.h.b16 %v794
    %v1382 = vunpack.c.l.b16 %v795
    %v1383 = vunpack.c.h.b16 %v795
    %v1384 = vunpack.c.l.b16 %v796
    %v1385 = vunpack.c.h.b16 %v796
    %v1386 = vunpack.c.l.b16 %v797
    %v1387 = vunpack.c.h.b16 %v797
    %v1388 = vunpack.c.l.b16 %v798
    %v1389 = vunpack.c.h.b16 %v798
    %v1390 = vunpack.c.l.b16 %v799
    %v1391 = vunpack.c.h.b16 %v799
    %v1392 = vunpack.c.l.b16 %v800
    %v1393 = vunpack.c.h.b16 %v800
    %v1394 = vunpack.c.l.b16 %v801
    %v1395 = vunpack.c.h.b16 %v801
    %v1396 = vunpack.c.l.b16 %v802
    %v1397 = vunpack.c.h.b16 %v802
    %v1398 = vunpack.c.l.b16 %v803
    %v1399 = vunpack.c.h.b16 %v803
    %v1400 = vunpack.c.l.b16 %v804
    %v1401 = vunpack.c.h.b16 %v804
    %v1402 = vunpack.c.l.b16 %v805
    %v1403 = vunpack.c.h.b16 %v805
    %v1404 = vunpack.c.l.b16 %v806
    %v1405 = vunpack.c.h.b16 %v806
    %v1406 = vunpack.c.l.b16 %v807
    %v1407 = vunpack.c.h.b16 %v807
    %v1408 = vunpack.c.l.b16 %v808
    %v1409 = vunpack.c.h.b16 %v808
    %v1410 = vunpack.c.l.b16 %v809
    %v1411 = vunpack.c.h.b16 %v809
    %v1412 = vunpack.c.l.b16 %v810
    %v1413 = vunpack.c.h.b16 %v810
    %v1414 = vunpack.c.l.b16 %v811
    %v1415 = vunpack.c.h.b16 %v811
    %v1416 = vunpack.c.l.b16 %v812
    %v1417 = vunpack.c.h.b16 %v812
    %v1418 = vunpack.c.l.b16 %v813
    %v1419 = vunpack.c.h.b16 %v813
    %v1420 = vunpack.c.l.b16 %v814
    %v1421 = vunpack.c.h.b16 %v814
    %v1422 = vunpack.c.l.b16 %v815
    %v1423 = vunpack.c.h.b16 %v815
    %v1424 = vunpack.c.l.b16 %v816
    %v1425 = vunpack.c.h.b16 %v816
    %v1426 = vunpack.c.l.b16 %v817
    %v1427 = vunpack.c.h.b16 %v817
    %v1428 = vunpack.c.l.b16 %v818
    %v1429 = vunpack.c.h.b16 %v818
    %v1430 = vunpack.c.l.b16 %v819
    %v1431 = vunpack.c.h.b16 %v819
    %v1432 = vunpack.c.l.b16 %v820
    %v1433 = vunpack.c.h.b16 %v820
    %v1434 = vunpack.c.l.b16 %v821
    %v1435 = vunpack.c.h.b16 %v821
    %v1436 = vunpack.c.l.b16 %v822
    %v1437 = vunpack.c.h.b16 %v822
    %v1438 = vunpack.c.l.b16 %v823
    %v1439 = vunpack.c.h.b16 %v823
    %v1440 = vunpack.c.l.b16 %v824
    %v1441 = vunpack.c.h.b16 %v824
    %v1442 = vunpack.c.l.b16 %v825
    %v1443 = vunpack.c.h.b16 %v825
    %v1444 = vunpack.c.l.b16 %v826
    %v1445 = vunpack.c.h.b16 %v826
    %v1446 = vunpack.c.l.b16 %v827
    %v1447 = vunpack.c.h.b16 %v827
    %v1448 = vunpack.c.l.b16 %v828
    %v1449 = vunpack.c.h.b16 %v828
    %v1450 = vunpack.c.l.b16 %v829
    %v1451 = vunpack.c.h.b16 %v829
    %v1452 = vunpack.c.l.b16 %v830
    %v1453 = vunpack.c.h.b16 %v830
    %v1454 = vunpack.c.l.b16 %v831
    %v1455 = vunpack.c.h.b16 %v831
    %v1456 = vunpack.c.l.b16 %v832
    %v1457 = vunpack.c.h.b16 %v832
    %v1458 = vunpack.c.l.b16 %v833
    %v1459 = vunpack.c.h.b16 %v833
    %v1460 = vunpack.c.l.b16 %v834
    %v1461 = vunpack.c.h.b16 %v834
    %v1462 = vunpack.c.l.b16 %v835
    %v1463 = vunpack.c.h.b16 %v835
    %v1464 = vunpack.c.l.b16 %v836
    %v1465 = vunpack.c.h.b16 %v836
    %v1466 = vunpack.c.l.b16 %v837
    %v1467 = vunpack.c.h.b16 %v837
    %v1468 = vunpack.c.l.b16 %v838
    %v1469 = vunpack.c.h.b16 %v838
    %v1470 = vunpack.c.l.b16 %v839
    %v1471 = vunpack.c.h.b16 %v839
    %v1472 = vunpack.c.l.b16 %v840
    %v1473 = vunpack.c.h.b16 %v840
    %v1474 = vunpack.c.l.b16 %v841
    %v1475 = vunpack.c.h.b16 %v841
    %v1476 = vunpack.c.l.b16 %v842
    %v1477 = vunpack.c.h.b16 %v842
    %v1478 = vunpack.c.l.b16 %v843
    %v1479 = vunpack.c.h.b16 %v843
    %v1480 = vunpack.c.l.b16 %v844
    %v1481 = vunpack.c.h.b16 %v844
    %v1482 = vunpack.c.l.b16 %v845
    %v1483 = vunpack.c.h.b16 %v845
    %v1484 = vunpack.c.l.b16 %v846
    %v1485 = vunpack.c.h.b16 %v846
    %v1486 = vunpack.c.l.b16 %v847
    %v1487 = vunpack.c.h.b16 %v847
    %v1488 = vunpack.c.l.b16 %v848
    %v1489 = vunpack.c.h.b16 %v848
    %v1490 = vunpack.c.l.b16 %v849
    %v1491 = vunpack.c.h.b16 %v849
    %v1492 = vunpack.c.l.b16 %v850
    %v1493 = vunpack.c.h.b16 %v850
    %v1494 = vunpack.c.l.b16 %v851
    %v1495 = vunpack.c.h.b16 %v851
    %v1496 = vunpack.c.l.b16 %v852
    %v1497 = vunpack.c.h.b16 %v852
    %v1498 = vunpack.c.l.b16 %v853
    %v1499 = vunpack.c.h.b16 %v853
    %v1500 = vunpack.c.l.b16 %v854
    %v1501 = vunpack.c.h.b16 %v854
    %v1502 = vunpack.c.l.b16 %v855
    %v1503 = vunpack.c.h.b16 %v855
    %v1504 = vunpack.c.l.b16 %v856
    %v1505 = vunpack.c.h.b16 %v856
    %v1506 = vunpack.c.l.b16 %v857
    %v1507 = vunpack.c.h.b16 %v857
    %v1508 = vunpack.c.l.b16 %v858
    %v1509 = vunpack.c.h.b16 %v858
    %v1510 = vunpack.c.l.b16 %v859
    %v1511 = vunpack.c.h.b16 %v859
    %v1512 = vunpack.c.l.b16 %v860
    %v1513 = vunpack.c.h.b16 %v860
    %v1514 = vunpack.c.l.b16 %v861
    %v1515 = vunpack.c.h.b16 %v861
    %v1516 = vunpack.c.l.b16 %v862
    %v1517 = vunpack.c.h.b16 %v862
    %v1518 = vunpack.c.l.b16 %v863
    %v1519 = vunpack.c.h.b16 %v863
    %v1520 = vunpack.c.l.b16 %v864
    %v1521 = vunpack.c.h.b16 %v864
    %v1522 = vunpack.c.l.b16 %v865
    %v1523 = vunpack.c.h.b16 %v865
    %v1524 = vunpack.c.l.b16 %v866
    %v1525 = vunpack.c.h.b16 %v866
    %v1526 = vunpack.c.l.b16 %v867
    %v1527 = vunpack.c.h.b16 %v867
    %v1528 = vunpack.c.l.b16 %v868
    %v1529 = vunpack.c.h.b16 %v868
    %v1530 = vunpack.c.l.b16 %v869
    %v1531 = vunpack.c.h.b16 %v869
    %v1532 = vunpack.c.l.b16 %v870
    %v1533 = vunpack.c.h.b16 %v870
    %v1534 = vunpack.c.l.b16 %v871
    %v1535 = vunpack.c.h.b16 %v871
    %v1536 = vunpack.c.l.b16 %v872
    %v1537 = vunpack.c.h.b16 %v872
    %v1538 = vunpack.c.l.b16 %v873
    %v1539 = vunpack.c.h.b16 %v873
    %v1540 = vunpack.c.l.b16 %v874
    %v1541 = vunpack.c.h.b16 %v874
    %v1542 = vunpack.c.l.b16 %v875
    %v1543 = vunpack.c.h.b16 %v875
    %v1544 = vunpack.c.l.b16 %v876
    %v1545 = vunpack.c.h.b16 %v876
    %v1546 = vunpack.c.l.b16 %v877
    %v1547 = vunpack.c.h.b16 %v877
    %v1548 = vunpack.c.l.b16 %v878
    %v1549 = vunpack.c.h.b16 %v878
    %v1550 = vunpack.c.l.b16 %v879
    %v1551 = vunpack.c.h.b16 %v879
    %v1552 = vunpack.c.l.b16 %v880
    %v1553 = vunpack.c.h.b16 %v880
    %v1554 = vunpack.c.l.b16 %v881
    %v1555 = vunpack.c.h.b16 %v881
    %v1556 = vunpack.c.l.b16 %v882
    %v1557 = vunpack.c.h.b16 %v882
    %v1558 = vunpack.c.l.b16 %v883
    %v1559 = vunpack.c.h.b16 %v883
    %v1560 = vunpack.c.l.b16 %v884
    %v1561 = vunpack.c.h.b16 %v884
    %v1562 = vunpack.c.l.b16 %v885
    %v1563 = vunpack.c.h.b16 %v885
    %v1564 = vunpack.c.l.b16 %v886
    %v1565 = vunpack.c.h.b16 %v886
    %v1566 = vunpack.c.l.b16 %v887
    %v1567 = vunpack.c.h.b16 %v887
    %v1568 = vunpack.c.l.b16 %v888
    %v1569 = vunpack.c.h.b16 %v888
    %v1570 = vunpack.c.l.b16 %v889
    %v1571 = vunpack.c.h.b16 %v889
    %v1572 = vunpack.c.l.b16 %v890
    %v1573 = vunpack.c.h.b16 %v890
    %v1574 = vunpack.c.l.b16 %v891
    %v1575 = vunpack.c.h.b16 %v891
    %v1576 = vunpack.c.l.b16 %v892
    %v1577 = vunpack.c.h.b16 %v892
    %v1578 = vunpack.c.l.b16 %v893
    %v1579 = vunpack.c.h.b16 %v893
    %v1580 = vunpack.c.l.b16 %v894
    %v1581 = vunpack.c.h.b16 %v894
    %v1582 = vunpack.c.l.b16 %v895
    %v1583 = vunpack.c.h.b16 %v895
    %v1584 = vunpack.c.l.b16 %v896
    %v1585 = vunpack.c.h.b16 %v896
    %v1586 = vunpack.c.l.b16 %v897
    %v1587 = vunpack.c.h.b16 %v897
    %v1588 = vunpack.c.l.b16 %v898
    %v1589 = vunpack.c.h.b16 %v898
    %v1590 = vunpack.c.l.b16 %v899
    %v1591 = vunpack.c.h.b16 %v899
    %v1592 = vunpack.c.l.b16 %v900
    %v1593 = vunpack.c.h.b16 %v900
    %v1594 = vunpack.c.l.b16 %v901
    %v1595 = vunpack.c.h.b16 %v901
    %v1596 = vunpack.c.l.b16 %v902
    %v1597 = vunpack.c.h.b16 %v902
    %v1598 = vunpack.c.l.b16 %v903
    %v1599 = vunpack.c.h.b16 %v903
    %v1600 = vunpack.c.l.b16 %v904
    %v1601 = vunpack.c.h.b16 %v904
    %v1602 = vunpack.c.l.b16 %v905
    %v1603 = vunpack.c.h.b16 %v905
    %v1604 = vunpack.c.l.b16 %v906
    %v1605 = vunpack.c.h.b16 %v906
    %v1606 = vunpack.c.l.b16 %v907
    %v1607 = vunpack.c.h.b16 %v907
    %v1608 = vunpack.c.l.b16 %v908
    %v1609 = vunpack.c.h.b16 %v908
    %v1610 = vunpack.c.l.b16 %v909
    %v1611 = vunpack.c.h.b16 %v909
    %v1612 = vunpack.c.l.b16 %v910
    %v1613 = vunpack.c.h.b16 %v910
    %v1614 = vunpack.c.l.b16 %v911
    %v1615 = vunpack.c.h.b16 %v911
    %v1616 = vunpack.c.l.b16 %v912
    %v1617 = vunpack.c.h.b16 %v912
    %v1618 = vunpack.c.l.b16 %v913
    %v1619 = vunpack.c.h.b16 %v913
    %v1620 = vunpack.c.l.b16 %v914
    %v1621 = vunpack.c.h.b16 %v914
    %v1622 = vunpack.c.l.b16 %v915
    %v1623 = vunpack.c.h.b16 %v915
    %v1624 = vunpack.c.l.b16 %v916
    %v1625 = vunpack.c.h.b16 %v916
    %v1626 = vunpack.c.l.b16 %v917
    %v1627 = vunpack.c.h.b16 %v917
    %v1628 = vunpack.c.l.b16 %v918
    %v1629 = vunpack.c.h.b16 %v918
    %v1630 = vunpack.c.l.b16 %v919
    %v1631 = vunpack.c.h.b16 %v919
    %v1632 = vunpack.c.l.b16 %v920
    %v1633 = vunpack.c.h.b16 %v920
    %v1634 = vunpack.c.l.b16 %v921
    %v1635 = vunpack.c.h.b16 %v921
    %v1636 = vunpack.c.l.b16 %v922
    %v1637 = vunpack.c.h.b16 %v922
    %v1638 = vunpack.c.l.b16 %v923
    %v1639 = vunpack.c.h.b16 %v923
    %v1640 = vunpack.c.l.b16 %v924
    %v1641 = vunpack.c.h.b16 %v924
    %v1642 = vunpack.c.l.b16 %v925
    %v1643 = vunpack.c.h.b16 %v925
    %v1644 = vunpack.c.l.b16 %v926
    %v1645 = vunpack.c.h.b16 %v926
    %v1646 = vunpack.c.l.b16 %v927
    %v1647 = vunpack.c.h.b16 %v927
    %v1648 = vunpack.c.l.b16 %v928
    %v1649 = vunpack.c.h.b16 %v928
    %v1650 = vunpack.c.l.b16 %v929
    %v1651 = vunpack.c.h.b16 %v929
    %v1652 = vunpack.c.l.b16 %v930
    %v1653 = vunpack.c.h.b16 %v930
    %v1654 = vunpack.c.l.b16 %v931
    %v1655 = vunpack.c.h.b16 %v931
    %v1656 = vunpack.c.l.b16 %v932
    %v1657 = vunpack.c.h.b16 %v932
    %v1658 = vunpack.c.l.b16 %v933
    %v1659 = vunpack.c.h.b16 %v933
    %v1660 = vunpack.c.l.b16 %v934
    %v1661 = vunpack.c.h.b16 %v934
    %v1662 = vunpack.c.l.b16 %v935
    %v1663 = vunpack.c.h.b16 %v935
    %v1664 = vunpack.c.l.b16 %v936
    %v1665 = vunpack.c.h.b16 %v936
    %v1666 = vunpack.c.l.b16 %v937
    %v1667 = vunpack.c.h.b16 %v937
    %v1668 = vunpack.c.l.b16 %v938
    %v1669 = vunpack.c.h.b16 %v938
    %v1670 = vunpack.c.l.b16 %v939
    %v1671 = vunpack.c.h.b16 %v939
    %v1672 = vunpack.c.l.b16 %v940
    %v1673 = vunpack.c.h.b16 %v940
    %v1674 = vunpack.c.l.b16 %v941
    %v1675 = vunpack.c.h.b16 %v941
    %v1676 = vunpack.c.l.b16 %v942
    %v1677 = vunpack.c.h.b16 %v942
    %v1678 = vunpack.c.l.b16 %v943
    %v1679 = vunpack.c.h.b16 %v943
    %v1680 = vunpack.c.l.b16 %v944
    %v1681 = vunpack.c.h.b16 %v944
    %v1682 = vunpack.c.l.b16 %v945
    %v1683 = vunpack.c.h.b16 %v945
    %v1684 = vunpack.c.l.b16 %v946
    %v1685 = vunpack.c.h.b16 %v946
    %v1686 = vunpack.c.l.b16 %v947
    %v1687 = vunpack.c.h.b16 %v947
    %v1688 = vunpack.c.l.b16 %v948
    %v1689 = vunpack.c.h.b16 %v948
    %v1690 = vunpack.c.l.b16 %v949
    %v1691 = vunpack.c.h.b16 %v949
    %v1692 = vunpack.c.l.b16 %v950
    %v1693 = vunpack.c.h.b16 %v950
    %v1694 = vunpack.c.l.b16 %v951
    %v1695 = vunpack.c.h.b16 %v951
    %v1696 = vunpack.c.l.b16 %v952
    %v1697 = vunpack.c.h.b16 %v952
    %v1698 = vunpack.c.l.b16 %v953
    %v1699 = vunpack.c.h.b16 %v953
    %v1700 = vunpack.c.l.b16 %v954
    %v1701 = vunpack.c.h.b16 %v954
    %v1702 = vunpack.c.l.b16 %v955
    %v1703 = vunpack.c.h.b16 %v955
    %v1704 = vunpack.c.l.b16 %v956
    %v1705 = vunpack.c.h.b16 %v956
    %v1706 = vunpack.c.l.b16 %v957
    %v1707 = vunpack.c.h.b16 %v957
    %v1708 = vunpack.c.l.b16 %v958
    %v1709 = vunpack.c.h.b16 %v958
    %v1710 = vunpack.c.l.b16 %v959
    %v1711 = vunpack.c.h.b16 %v959
    %v1712 = vunpack.c.l.b16 %v960
    %v1713 = vunpack.c.h.b16 %v960
    %v1714 = vunpack.c.l.b16 %v961
    %v1715 = vunpack.c.h.b16 %v961
    %v1716 = vunpack.c.l.b16 %v962
    %v1717 = vunpack.c.h.b16 %v962
    %v1718 = vunpack.c.l.b16 %v963
    %v1719 = vunpack.c.h.b16 %v963
    %v1720 = vunpack.c.l.b16 %v964
    %v1721 = vunpack.c.h.b16 %v964
    %v1722 = vunpack.c.l.b16 %v965
    %v1723 = vunpack.c.h.b16 %v965
    %v1724 = vunpack.c.l.b16 %v966
    %v1725 = vunpack.c.h.b16 %v966
    %v1726 = vunpack.c.l.b16 %v967
    %v1727 = vunpack.c.h.b16 %v967
    %v1728 = vunpack.c.l.b16 %v968
    %v1729 = vunpack.c.h.b16 %v968
    %v1730 = vunpack.c.l.b16 %v969
    %v1731 = vunpack.c.h.b16 %v969
    %v1732 = vunpack.c.l.b16 %v970
    %v1733 = vunpack.c.h.b16 %v970
    %v1734 = vunpack.c.l.b16 %v971
    %v1735 = vunpack.c.h.b16 %v971
    %v1736 = vunpack.c.l.b16 %v972
    %v1737 = vunpack.c.h.b16 %v972
    %v1738 = vunpack.c.l.b16 %v973
    %v1739 = vunpack.c.h.b16 %v973
    %v1740 = vunpack.c.l.b16 %v974
    %v1741 = vunpack.c.h.b16 %v974
    %v1742 = vunpack.c.l.b16 %v975
    %v1743 = vunpack.c.h.b16 %v975
    %v1744 = vunpack.c.l.b16 %v976
    %v1745 = vunpack.c.h.b16 %v976
    %v1746 = vunpack.c.l.b16 %v977
    %v1747 = vunpack.c.h.b16 %v977
    %v1748 = vunpack.c.l.b16 %v978
    %v1749 = vunpack.c.h.b16 %v978
    %v1750 = vunpack.c.l.b16 %v979
    %v1751 = vunpack.c.h.b16 %v979
    %v1752 = vunpack.c.l.b16 %v980
    %v1753 = vunpack.c.h.b16 %v980
    %v1754 = vunpack.c.l.b16 %v981
    %v1755 = vunpack.c.h.b16 %v981
    %v1756 = vunpack.c.l.b16 %v982
    %v1757 = vunpack.c.h.b16 %v982
    %v1758 = vunpack.c.l.b16 %v983
    %v1759 = vunpack.c.h.b16 %v983
    %v1760 = vunpack.c.l.b16 %v984
    %v1761 = vunpack.c.h.b16 %v984
    %v1762 = vunpack.c.l.b16 %v985
    %v1763 = vunpack.c.h.b16 %v985
    %v1764 = vunpack.c.l.b16 %v986
    %v1765 = vunpack.c.h.b16 %v986
    %v1766 = vunpack.c.l.b16 %v987
    %v1767 = vunpack.c.h.b16 %v987
    %v1768 = vunpack.c.l.b16 %v988
    %v1769 = vunpack.c.h.b16 %v988
    %v1770 = vunpack.c.l.b16 %v989
    %v1771 = vunpack.c.h.b16 %v989
    %v1772 = vunpack.c.l.b16 %v990
    %v1773 = vunpack.c.h.b16 %v990
    %v1774 = vunpack.c.l.b16 %v991
    %v1775 = vunpack.c.h.b16 %v991
    %v1776 = vunpack.c.l.b16 %v992
    %v1777 = vunpack.c.h.b16 %v992
    %v1778 = vunpack.c.l.b16 %v993
    %v1779 = vunpack.c.h.b16 %v993
    %v1780 = vunpack.c.l.b16 %v994
    %v1781 = vunpack.c.h.b16 %v994
    %v1782 = vunpack.c.l.b16 %v995
    %v1783 = vunpack.c.h.b16 %v995
    %v1784 = vunpack.c.l.b16 %v996
    %v1785 = vunpack.c.h.b16 %v996
    %v1786 = vunpack.c.l.b16 %v997
    %v1787 = vunpack.c.h.b16 %v997
    %v1788 = vunpack.c.l.b16 %v998
    %v1789 = vunpack.c.h.b16 %v998
    %v1790 = vunpack.c.l.b16 %v999
    %v1791 = vunpack.c.h.b16 %v999
    %v1792 = vunpack.c.l.b16 %v1000
    %v1793 = vunpack.c.h.b16 %v1000
    %v1794 = vunpack.c.l.b16 %v1001
    %v1795 = vunpack.c.h.b16 %v1001
    %v1796 = vunpack.c.l.b16 %v1002
    %v1797 = vunpack.c.h.b16 %v1002
    %v1798 = vunpack.c.l.b16 %v1003
    %v1799 = vunpack.c.h.b16 %v1003
    %v1800 = vunpack.c.l.b16 %v1004
    %v1801 = vunpack.c.h.b16 %v1004
    %v1802 = vunpack.c.l.b16 %v1005
    %v1803 = vunpack.c.h.b16 %v1005
    %v1804 = vunpack.c.l.b16 %v1006
    %v1805 = vunpack.c.h.b16 %v1006
    %v1806 = vunpack.c.l.b16 %v1007
    %v1807 = vunpack.c.h.b16 %v1007
    %v1808 = vunpack.c.l.b16 %v1008
    %v1809 = vunpack.c.h.b16 %v1008
    %v1810 = vunpack.c.l.b16 %v1009
    %v1811 = vunpack.c.h.b16 %v1009
    %v1812 = vunpack.c.l.b16 %v1010
    %v1813 = vunpack.c.h.b16 %v1010
    %v1814 = vunpack.c.l.b16 %v1011
    %v1815 = vunpack.c.h.b16 %v1011
    %v1816 = vunpack.c.l.b16 %v1012
    %v1817 = vunpack.c.h.b16 %v1012
    %v1818 = vunpack.c.l.b16 %v1013
    %v1819 = vunpack.c.h.b16 %v1013
    %v1820 = vunpack.c.l.b16 %v1014
    %v1821 = vunpack.c.h.b16 %v1014
    %v1822 = vunpack.c.l.b16 %v1015
    %v1823 = vunpack.c.h.b16 %v1015
    %v1824 = vunpack.c.l.b16 %v1016
    %v1825 = vunpack.c.h.b16 %v1016
    %v1826 = vunpack.c.l.b16 %v1017
    %v1827 = vunpack.c.h.b16 %v1017
    %v1828 = vpack.c.b16 %v1324, %v1316
    %v1829 = vpack.c.b16 %v1325, %v1317
    %v1830 = vpack.c.b16 %v1326, %v1318
    %v1831 = vpack.c.b16 %v1327, %v1319
    %v1832 = vpack.c.b16 %v1328, %v1320
    %v1833 = vpack.c.b16 %v1329, %v1321
    %v1834 = vpack.c.b16 %v1330, %v1322
    %v1835 = vpack.c.b16 %v1331, %v1323
    %v1836 = vpack.c.b16 %v1340, %v1332
    %v1837 = vpack.c.b16 %v1341, %v1333
    %v1838 = vpack.c.b16 %v1342, %v1334
    %v1839 = vpack.c.b16 %v1343, %v1335
    %v1840 = vpack.c.b16 %v1344, %v1336
    %v1841 = vpack.c.b16 %v1345, %v1337
    %v1842 = vpack.c.b16 %v1346, %v1338
    %v1843 = vpack.c.b16 %v1347, %v1339
    %v1844 = vpack.c.b16 %v1356, %v1348
    %v1845 = vpack.c.b16 %v1357, %v1349
    %v1846 = vpack.c.b16 %v1358, %v1350
    %v1847 = vpack.c.b16 %v1359, %v1351
    %v1848 = vpack.c.b16 %v1360, %v1352
    %v1849 = vpack.c.b16 %v1361, %v1353
    %v1850 = vpack.c.b16 %v1362, %v1354
    %v1851 = vpack.c.b16 %v1363, %v1355
    %v1852 = vpack.c.b16 %v1372, %v1364
    %v1853 = vpack.c.b16 %v1373, %v1365
    %v1854 = vpack.c.b16 %v1374, %v1366
    %v1855 = vpack.c.b16 %v1375, %v1367
    %v1856 = vpack.c.b16 %v1376, %v1368
    %v1857 = vpack.c.b16 %v1377, %v1369
    %v1858 = vpack.c.b16 %v1378, %v1370
    %v1859 = vpack.c.b16 %v1379, %v1371
    %v1860 = vpack.c.b16 %v1388, %v1380
    %v1861 = vpack.c.b16 %v1389, %v1381
    %v1862 = vpack.c.b16 %v1390, %v1382
    %v1863 = vpack.c.b16 %v1391, %v1383
    %v1864 = vpack.c.b16 %v1392, %v1384
    %v1865 = vpack.c.b16 %v1393, %v1385
    %v1866 = vpack.c.b16 %v1394, %v1386
    %v1867 = vpack.c.b16 %v1395, %v1387
    %v1868 = vpack.c.b16 %v1404, %v1396
    %v1869 = vpack.c.b16 %v1405, %v1397
    %v1870 = vpack.c.b16 %v1406, %v1398
    %v1871 = vpack.c.b16 %v1407, %v1399
    %v1872 = vpack.c.b16 %v1408, %v1400
    %v1873 = vpack.c.b16 %v1409, %v1401
    %v1874 = vpack.c.b16 %v1410, %v1402
    %v1875 = vpack.c.b16 %v1411, %v1403
    %v1876 = vpack.c.b16 %v1420, %v1412
    %v1877 = vpack.c.b16 %v1421, %v1413
    %v1878 = vpack.c.b16 %v1422, %v1414
    %v1879 = vpack.c.b16 %v1423, %v1415
    %v1880 = vpack.c.b16 %v1424, %v1416
    %v1881 = vpack.c.b16 %v1425, %v1417
    %v1882 = vpack.c.b16 %v1426, %v1418
    %v1883 = vpack.c.b16 %v1427, %v1419
    %v1884 = vpack.c.b16 %v1436, %v1428
    %v1885 = vpack.c.b16 %v1437, %v1429
    %v1886 = vpack.c.b16 %v1438, %v1430
    %v1887 = vpack.c.b16 %v1439, %v1431
    %v1888 = vpack.c.b16 %v1440, %v1432
    %v1889 = vpack.c.b16 %v1441, %v1433
    %v1890 = vpack.c.b16 %v1442, %v1434
    %v1891 = vpack.c.b16 %v1443, %v1435
    %v1892 = vpack.c.b16 %v1452, %v1444
    %v1893 = vpack.c.b16 %v1453, %v1445
    %v1894 = vpack.c.b16 %v1454, %v1446
    %v1895 = vpack.c.b16 %v1455, %v1447
    %v1896 = vpack.c.b16 %v1456, %v1448
    %v1897 = vpack.c.b16 %v1457, %v1449
    %v1898 = vpack.c.b16 %v1458, %v1450
    %v1899 = vpack.c.b16 %v1459, %v1451
    %v1900 = vpack.c.b16 %v1468, %v1460
    %v1901 = vpack.c.b16 %v1469, %v1461
    %v1902 = vpack.c.b16 %v1470, %v1462
    %v1903 = vpack.c.b16 %v1471, %v1463
    %v1904 = vpack.c.b16 %v1472, %v1464
    %v1905 = vpack.c.b16 %v1473, %v1465
    %v1906 = vpack.c.b16 %v1474, %v1466
    %v1907 = vpack.c.b16 %v1475, %v1467
    %v1908 = vpack.c.b16 %v1484, %v1476
    %v1909 = vpack.c.b16 %v1485, %v1477
    %v1910 = vpack.c.b16 %v1486, %v1478
    %v1911 = vpack.c.b16 %v1487, %v1479
    %v1912 = vpack.c.b16 %v1488, %v1480
    %v1913 = vpack.c.b16 %v1489, %v1481
    %v1914 = vpack.c.b16 %v1490, %v1482
    %v1915 = vpack.c.b16 %v1491, %v1483
    %v1916 = vpack.c.b16 %v1500, %v1492
    %v1917 = vpack.c.b16 %v1501, %v1493
    %v1918 = vpack.c.b16 %v1502, %v1494
    %v1919 = vpack.c.b16 %v1503, %v1495
    %v1920 = vpack.c.b16 %v1504, %v1496
    %v1921 = vpack.c.b16 %v1505, %v1497
    %v1922 = vpack.c.b16 %v1506, %v1498
    %v1923 = vpack.c.b16 %v1507, %v1499
    %v1924 = vpack.c.b16 %v1516, %v1508
    %v1925 = vpack.c.b16 %v1517, %v1509
    %v1926 = vpack.c.b16 %v1518, %v1510
    %v1927 = vpack.c.b16 %v1519, %v1511
    %v1928 = vpack.c.b16 %v1520, %v1512
    %v1929 = vpack.c.b16 %v1521, %v1513
    %v1930 = vpack.c.b16 %v1522, %v1514
    %v1931 = vpack.c.b16 %v1523, %v1515
    %v1932 = vpack.c.b16 %v1532, %v1524
    %v1933 = vpack.c.b16 %v1533, %v1525
    %v1934 = vpack.c.b16 %v1534, %v1526
    %v1935 = vpack.c.b16 %v1535, %v1527
    %v1936 = vpack.c.b16 %v1536, %v1528
    %v1937 = vpack.c.b16 %v1537, %v1529
    %v1938 = vpack.c.b16 %v1538, %v1530
    %v1939 = vpack.c.b16 %v1539, %v1531
    %v1940 = vpack.c.b16 %v1548, %v1540
    %v1941 = vpack.c.b16 %v1549, %v1541
    %v1942 = vpack.c.b16 %v1550, %v1542
    %v1943 = vpack.c.b16 %v1551, %v1543
    %v1944 = vpack.c.b16 %v1552, %v1544
    %v1945 = vpack.c.b16 %v1553, %v1545
    %v1946 = vpack.c.b16 %v1554, %v1546
    %v1947 = vpack.c.b16 %v1555, %v1547
    %v1948 = vpack.c.b16 %v1564, %v1556
    %v1949 = vpack.c.b16 %v1565, %v1557
    %v1950 = vpack.c.b16 %v1566, %v1558
    %v1951 = vpack.c.b16 %v1567, %v1559
    %v1952 = vpack.c.b16 %v1568, %v1560
    %v1953 = vpack.c.b16 %v1569, %v1561
    %v1954 = vpack.c.b16 %v1570, %v1562
    %v1955 = vpack.c.b16 %v1571, %v1563
    %v1956 = vpack.c.b16 %v1580, %v1572
    %v1957 = vpack.c.b16 %v1581, %v1573
    %v1958 = vpack.c.b16 %v1582, %v1574
    %v1959 = vpack.c.b16 %v1583, %v1575
    %v1960 = vpack.c.b16 %v1584, %v1576
    %v1961 = vpack.c.b16 %v1585, %v1577
    %v1962 = vpack.c.b16 %v1586, %v1578
    %v1963 = vpack.c.b16 %v1587, %v1579
    %v1964 = vpack.c.b16 %v1596, %v1588
    %v1965 = vpack.c.b16 %v1597, %v1589
    %v1966 = vpack.c.b16 %v1598, %v1590
    %v1967 = vpack.c.b16 %v1599, %v1591
    %v1968 = vpack.c.b16 %v1600, %v1592
    %v1969 = vpack.c.b16 %v1601, %v1593
    %v1970 = vpack.c.b16 %v1602, %v1594
    %v1971 = vpack.c.b16 %v1603, %v1595
    %v1972 = vpack.c.b16 %v1612, %v1604
    %v1973 = vpack.c.b16 %v1613, %v1605
    %v1974 = vpack.c.b16 %v1614, %v1606
    %v1975 = vpack.c.b16 %v1615, %v1607
    %v1976 = vpack.c.b16 %v1616, %v1608
    %v1977 = vpack.c.b16 %v1617, %v1609
    %v1978 = vpack.c.b16 %v1618, %v1610
    %v1979 = vpack.c.b16 %v1619, %v1611
    %v1980 = vpack.c.b16 %v1628, %v1620
    %v1981 = vpack.c.b16 %v1629, %v1621
    %v1982 = vpack.c.b16 %v1630, %v1622
    %v1983 = vpack.c.b16 %v1631, %v1623
    %v1984 = vpack.c.b16 %v1632, %v1624
    %v1985 = vpack.c.b16 %v1633, %v1625
    %v1986 = vpack.c.b16 %v1634, %v1626
    %v1987 = vpack.c.b16 %v1635, %v1627
    %v1988 = vpack.c.b16 %v1644, %v1636
    %v1989 = vpack.c.b16 %v1645, %v1637
    %v1990 = vpack.c.b16 %v1646, %v1638
    %v1991 = vpack.c.b16 %v1647, %v1639
    %v1992 = vpack.c.b16 %v1648, %v1640
    %v1993 = vpack.c.b16 %v1649, %v1641
    %v1994 = vpack.c.b16 %v1650, %v1642
    %v1995 = vpack.c.b16 %v1651, %v1643
    %v1996 = vpack.c.b16 %v1660, %v1652
    %v1997 = vpack.c.b16 %v1661, %v1653
    %v1998 = vpack.c.b16 %v1662, %v1654
    %v1999 = vpack.c.b16 %v1663, %v1655
    %v2000 = vpack.c.b16 %v1664, %v1656
    %v2001 = vpack.c.b16 %v1665, %v1657
    %v2002 = vpack.c.b16 %v1666, %v1658
    %v2003 = vpack.c.b16 %v1667, %v1659
    %v2004 = vpack.c.b16 %v1676, %v1668
    %v2005 = vpack.c.b16 %v1677, %v1669
    %v2006 = vpack.c.b16 %v1678, %v1670
    %v2007 = vpack.c.b16 %v1679, %v1671
    %v2008 = vpack.c.b16 %v1680, %v1672
    %v2009 = vpack.c.b16 %v1681, %v1673
    %v2010 = vpack.c.b16 %v1682, %v1674
    %v2011 = vpack.c.b16 %v1683, %v1675
    %v2012 = vpack.c.b16 %v1692, %v1684
    %v2013 = vpack.c.b16 %v1693, %v1685
    %v2014 = vpack.c.b16 %v1694, %v1686
    %v2015 = vpack.c.b16 %v1695, %v1687
    %v2016 = vpack.c.b16 %v1696, %v1688
    %v2017 = vpack.c.b16 %v1697, %v1689
    %v2018 = vpack.c.b16 %v1698, %v1690
    %v2019 = vpack.c.b16 %v1699, %v1691
    %v2020 = vpack.c.b16 %v1708, %v1700
    %v2021 = vpack.c.b16 %v1709, %v1701
    %v2022 = vpack.c.b16 %v1710, %v1702
    %v2023 = vpack.c.b16 %v1711, %v1703
    %v2024 = vpack.c.b16 %v1712, %v1704
    %v2025 = vpack.c.b16 %v1713, %v1705
    %v2026 = vpack.c.b16 %v1714, %v1706
    %v2027 = vpack.c.b16 %v1715, %v1707
    %v2028 = vpack.c.b16 %v1724, %v1716
    %v2029 = vpack.c.b16 %v1725, %v1717
    %v2030 = vpack.c.b16 %v1726, %v1718
    %v2031 = vpack.c.b16 %v1727, %v1719
    %v2032 = vpack.c.b16 %v1728, %v1720
    %v2033 = vpack.c.b16 %v1729, %v1721
    %v2034 = vpack.c.b16 %v1730, %v1722
    %v2035 = vpack.c.b16 %v1731, %v1723
    %v2036 = vpack.c.b16 %v1740, %v1732
    %v2037 = vpack.c.b16 %v1741, %v1733
    %v2038 = vpack.c.b16 %v1742, %v1734
    %v2039 = vpack.c.b16 %v1743, %v1735
    %v2040 = vpack.c.b16 %v1744, %v1736
    %v2041 = vpack.c.b16 %v1745, %v1737
    %v2042 = vpack.c.b16 %v1746, %v1738
    %v2043 = vpack.c.b16 %v1747, %v1739
    %v2044 = vpack.c.b16 %v1756, %v1748
    %v2045 = vpack.c.b16 %v1757, %v1749
    %v2046 = vpack.c.b16 %v1758, %v1750
    %v2047 = vpack.c.b16 %v1759, %v1751
    %v2048 = vpack.c.b16 %v1760, %v1752
    %v2049 = vpack.c.b16 %v1761, %v1753
    %v2050 = vpack.c.b16 %v1762, %v1754
    %v2051 = vpack.c.b16 %v1763, %v1755
    %v2052 = vpack.c.b16 %v1772, %v1764
    %v2053 = vpack.c.b16 %v1773, %v1765
    %v2054 = vpack.c.b16 %v1774, %v1766
    %v2055 = vpack.c.b16 %v1775, %v1767
    %v2056 = vpack.c.b16 %v1776, %v1768
    %v2057 = vpack.c.b16 %v1777, %v1769
    %v2058 = vpack.c.b16 %v1778, %v1770
    %v2059 = vpack.c.b16 %v1779, %v1771
    %v2060 = vpack.c.b16 %v1788, %v1780
    %v2061 = vpack.c.b16 %v1789, %v1781
    %v2062 = vpack.c.b16 %v1790, %v1782
    %v2063 = vpack.c.b16 %v1791, %v1783
    %v2064 = vpack.c.b16 %v1792, %v1784
    %v2065 = vpack.c.b16 %v1793, %v1785
    %v2066 = vpack.c.b16 %v1794, %v1786
    %v2067 = vpack.c.b16 %v1795, %v1787
    %v2068 = vpack.c.b16 %v1804, %v1796
    %v2069 = vpack.c.b16 %v1805, %v1797
    %v2070 = vpack.c.b16 %v1806, %v1798
    %v2071 = vpack.c.b16 %v1807, %v1799
    %v2072 = vpack.c.b16 %v1808, %v1800
    %v2073 = vpack.c.b16 %v1809, %v1801
    %v2074 = vpack.c.b16 %v1810, %v1802
    %v2075 = vpack.c.b16 %v1811, %v1803
    %v2076 = vpack.c.b16 %v1820, %v1812
    %v2077 = vpack.c.b16 %v1821, %v1813
    %v2078 = vpack.c.b16 %v1822, %v1814
    %v2079 = vpack.c.b16 %v1823, %v1815
    %v2080 = vpack.c.b16 %v1824, %v1816
    %v2081 = vpack.c.b16 %v1825, %v1817
    %v2082 = vpack.c.b16 %v1826, %v1818
    %v2083 = vpack.c.b16 %v1827, %v1819
    %2340 = vmatprep.subr.bf16.mxu0 %v1885
    %2341 = vmatpush1.bf16.msra.mxu0 %v1884
    %2342 = vmatprep.subr.bf16.mxu0 %v1877
    %2343 = vmatpush1.bf16.msra.mxu0 %v1876
    %2344 = vmatprep.subr.bf16.mxu0 %v1869
    %2345 = vmatpush1.bf16.msra.mxu0 %v1868
    %2346 = vmatprep.subr.bf16.mxu0 %v1861
    %2347 = vmatpush1.bf16.msra.mxu0 %v1860
    %2348 = vmatprep.subr.bf16.mxu0 %v1853
    %2349 = vmatpush1.bf16.msra.mxu0 %v1852
    %2350 = vmatprep.subr.bf16.mxu0 %v1845
    %2351 = vmatpush1.bf16.msra.mxu0 %v1844
    %2352 = vmatprep.subr.bf16.mxu0 %v1837
    %2353 = vmatpush1.bf16.msra.mxu0 %v1836
    %2354 = vmatprep.subr.bf16.mxu0 %v1829
    %2355 = vmatpush1.bf16.msra.mxu0 %v1828
    %2356 = vmatprep.subr.bf16.mxu0 %v1949
    %2357 = vmatpush2.bf16.msra.mxu0 %v1948
    %2358 = vmatprep.subr.bf16.mxu0 %v1941
    %2359 = vmatpush2.bf16.msra.mxu0 %v1940
    %2360 = vmatprep.subr.bf16.mxu0 %v1933
    %2361 = vmatpush2.bf16.msra.mxu0 %v1932
    %2362 = vmatprep.subr.bf16.mxu0 %v1925
    %2363 = vmatpush2.bf16.msra.mxu0 %v1924
    %2364 = vmatprep.subr.bf16.mxu0 %v1917
    %2365 = vmatpush2.bf16.msra.mxu0 %v1916
    %2366 = vmatprep.subr.bf16.mxu0 %v1909
    %2367 = vmatpush2.bf16.msra.mxu0 %v1908
    %2368 = vmatprep.subr.bf16.mxu0 %v1901
    %2369 = vmatpush2.bf16.msra.mxu0 %v1900
    %2370 = vmatprep.subr.bf16.mxu0 %v1893
    %2371 = vmatpush2.bf16.msra.mxu0 %v1892
    %2372 = vmatprep.mubr.bf16.mxu0 %v759
    %2373 = vmatmul.mubr.bf16.gmra.mxu0 %v758
    %v2374 = vpop.f32.mrf.mxu0
    %v2375 = vadd.f32 %v1023, %v2374
    %v2376 = vpop.f32.mrf.mxu0
    %v2377 = vadd.f32 %v1027, %v2376
    %v2378 = vpop.f32.mrf.mxu0
    %v2379 = vpop.f32.mrf.mxu0
    %2380 = vdwg.mxu0
    %2381 = vmatprep.subr.bf16.mxu0 %v2013
    %2382 = vmatpush1.bf16.msra.mxu0 %v2012
    %2383 = vmatprep.subr.bf16.mxu0 %v2005
    %2384 = vmatpush1.bf16.msra.mxu0 %v2004
    %2385 = vmatprep.subr.bf16.mxu0 %v1997
    %2386 = vmatpush1.bf16.msra.mxu0 %v1996
    %2387 = vmatprep.subr.bf16.mxu0 %v1989
    %2388 = vmatpush1.bf16.msra.mxu0 %v1988
    %2389 = vmatprep.subr.bf16.mxu0 %v1981
    %2390 = vmatpush1.bf16.msra.mxu0 %v1980
    %2391 = vmatprep.subr.bf16.mxu0 %v1973
    %2392 = vmatpush1.bf16.msra.mxu0 %v1972
    %2393 = vmatprep.subr.bf16.mxu0 %v1965
    %2394 = vmatpush1.bf16.msra.mxu0 %v1964
    %2395 = vmatprep.subr.bf16.mxu0 %v1957
    %2396 = vmatpush1.bf16.msra.mxu0 %v1956
    %2397 = vmatprep.subr.bf16.mxu0 %v2077
    %2398 = vmatpush2.bf16.msra.mxu0 %v2076
    %2399 = vmatprep.subr.bf16.mxu0 %v2069
    %2400 = vmatpush2.bf16.msra.mxu0 %v2068
    %2401 = vmatprep.subr.bf16.mxu0 %v2061
    %2402 = vmatpush2.bf16.msra.mxu0 %v2060
    %2403 = vmatprep.subr.bf16.mxu0 %v2053
    %2404 = vmatpush2.bf16.msra.mxu0 %v2052
    %2405 = vmatprep.subr.bf16.mxu0 %v2045
    %2406 = vmatpush2.bf16.msra.mxu0 %v2044
    %2407 = vmatprep.subr.bf16.mxu0 %v2037
    %2408 = vmatpush2.bf16.msra.mxu0 %v2036
    %2409 = vmatprep.subr.bf16.mxu0 %v2029
    %2410 = vmatpush2.bf16.msra.mxu0 %v2028
    %2411 = vmatprep.subr.bf16.mxu0 %v2021
    %2412 = vmatpush2.bf16.msra.mxu0 %v2020
    %2413 = vmatprep.mubr.bf16.mxu0 %v761
    %2414 = vmatmul.mubr.bf16.gmra.mxu0 %v760
    %v2415 = vpop.f32.mrf.mxu0
    %v2416 = vadd.f32 %v2375, %v2415
    %v2417 = vpop.f32.mrf.mxu0
    %v2418 = vadd.f32 %v2377, %v2417
    %v2419 = vpop.f32.mrf.mxu0
    %v2420 = vpop.f32.mrf.mxu0
    %2421 = vdwg.mxu0
    %2422 = vmatprep.subr.bf16.mxu0 %v1887
    %2423 = vmatpush1.bf16.msra.mxu0 %v1886
    %2424 = vmatprep.subr.bf16.mxu0 %v1879
    %2425 = vmatpush1.bf16.msra.mxu0 %v1878
    %2426 = vmatprep.subr.bf16.mxu0 %v1871
    %2427 = vmatpush1.bf16.msra.mxu0 %v1870
    %2428 = vmatprep.subr.bf16.mxu0 %v1863
    %2429 = vmatpush1.bf16.msra.mxu0 %v1862
    %2430 = vmatprep.subr.bf16.mxu0 %v1855
    %2431 = vmatpush1.bf16.msra.mxu0 %v1854
    %2432 = vmatprep.subr.bf16.mxu0 %v1847
    %2433 = vmatpush1.bf16.msra.mxu0 %v1846
    %2434 = vmatprep.subr.bf16.mxu0 %v1839
    %2435 = vmatpush1.bf16.msra.mxu0 %v1838
    %2436 = vmatprep.subr.bf16.mxu0 %v1831
    %2437 = vmatpush1.bf16.msra.mxu0 %v1830
    %2438 = vmatprep.subr.bf16.mxu0 %v1951
    %2439 = vmatpush2.bf16.msra.mxu0 %v1950
    %2440 = vmatprep.subr.bf16.mxu0 %v1943
    %2441 = vmatpush2.bf16.msra.mxu0 %v1942
    %2442 = vmatprep.subr.bf16.mxu0 %v1935
    %2443 = vmatpush2.bf16.msra.mxu0 %v1934
    %2444 = vmatprep.subr.bf16.mxu0 %v1927
    %2445 = vmatpush2.bf16.msra.mxu0 %v1926
    %2446 = vmatprep.subr.bf16.mxu0 %v1919
    %2447 = vmatpush2.bf16.msra.mxu0 %v1918
    %2448 = vmatprep.subr.bf16.mxu0 %v1911
    %2449 = vmatpush2.bf16.msra.mxu0 %v1910
    %2450 = vmatprep.subr.bf16.mxu0 %v1903
    %2451 = vmatpush2.bf16.msra.mxu0 %v1902
    %2452 = vmatprep.subr.bf16.mxu0 %v1895
    %2453 = vmatpush2.bf16.msra.mxu0 %v1894
    %2454 = vmatprep.mubr.bf16.mxu0 %v759
    %2455 = vmatmul.mubr.bf16.gmra.mxu0 %v758
    %v2456 = vpop.f32.mrf.mxu0
    %v2457 = vadd.f32 %v1031, %v2456
    %v2458 = vpop.f32.mrf.mxu0
    %v2459 = vadd.f32 %v1035, %v2458
    %v2460 = vpop.f32.mrf.mxu0
    %v2461 = vpop.f32.mrf.mxu0
    %2462 = vdwg.mxu0
    %2463 = vmatprep.subr.bf16.mxu0 %v2015
    %2464 = vmatpush1.bf16.msra.mxu0 %v2014
    %2465 = vmatprep.subr.bf16.mxu0 %v2007
    %2466 = vmatpush1.bf16.msra.mxu0 %v2006
    %2467 = vmatprep.subr.bf16.mxu0 %v1999
    %2468 = vmatpush1.bf16.msra.mxu0 %v1998
    %2469 = vmatprep.subr.bf16.mxu0 %v1991
    %2470 = vmatpush1.bf16.msra.mxu0 %v1990
    %2471 = vmatprep.subr.bf16.mxu0 %v1983
    %2472 = vmatpush1.bf16.msra.mxu0 %v1982
    %2473 = vmatprep.subr.bf16.mxu0 %v1975
    %2474 = vmatpush1.bf16.msra.mxu0 %v1974
    %2475 = vmatprep.subr.bf16.mxu0 %v1967
    %2476 = vmatpush1.bf16.msra.mxu0 %v1966
    %2477 = vmatprep.subr.bf16.mxu0 %v1959
    %2478 = vmatpush1.bf16.msra.mxu0 %v1958
    %2479 = vmatprep.subr.bf16.mxu0 %v2079
    %2480 = vmatpush2.bf16.msra.mxu0 %v2078
    %2481 = vmatprep.subr.bf16.mxu0 %v2071
    %2482 = vmatpush2.bf16.msra.mxu0 %v2070
    %2483 = vmatprep.subr.bf16.mxu0 %v2063
    %2484 = vmatpush2.bf16.msra.mxu0 %v2062
    %2485 = vmatprep.subr.bf16.mxu0 %v2055
    %2486 = vmatpush2.bf16.msra.mxu0 %v2054
    %2487 = vmatprep.subr.bf16.mxu0 %v2047
    %2488 = vmatpush2.bf16.msra.mxu0 %v2046
    %2489 = vmatprep.subr.bf16.mxu0 %v2039
    %2490 = vmatpush2.bf16.msra.mxu0 %v2038
    %2491 = vmatprep.subr.bf16.mxu0 %v2031
    %2492 = vmatpush2.bf16.msra.mxu0 %v2030
    %2493 = vmatprep.subr.bf16.mxu0 %v2023
    %2494 = vmatpush2.bf16.msra.mxu0 %v2022
    %2495 = vmatprep.mubr.bf16.mxu0 %v761
    %2496 = vmatmul.mubr.bf16.gmra.mxu0 %v760
    %v2497 = vpop.f32.mrf.mxu0
    %v2498 = vadd.f32 %v2457, %v2497
    %v2499 = vpop.f32.mrf.mxu0
    %v2500 = vadd.f32 %v2459, %v2499
    %v2501 = vpop.f32.mrf.mxu0
    %v2502 = vpop.f32.mrf.mxu0
    %2503 = vdwg.mxu0
    %2504 = vmatprep.subr.bf16.mxu0 %v1889
    %2505 = vmatpush1.bf16.msra.mxu0 %v1888
    %2506 = vmatprep.subr.bf16.mxu0 %v1881
    %2507 = vmatpush1.bf16.msra.mxu0 %v1880
    %2508 = vmatprep.subr.bf16.mxu0 %v1873
    %2509 = vmatpush1.bf16.msra.mxu0 %v1872
    %2510 = vmatprep.subr.bf16.mxu0 %v1865
    %2511 = vmatpush1.bf16.msra.mxu0 %v1864
    %2512 = vmatprep.subr.bf16.mxu0 %v1857
    %2513 = vmatpush1.bf16.msra.mxu0 %v1856
    %2514 = vmatprep.subr.bf16.mxu0 %v1849
    %2515 = vmatpush1.bf16.msra.mxu0 %v1848
    %2516 = vmatprep.subr.bf16.mxu0 %v1841
    %2517 = vmatpush1.bf16.msra.mxu0 %v1840
    %2518 = vmatprep.subr.bf16.mxu0 %v1833
    %2519 = vmatpush1.bf16.msra.mxu0 %v1832
    %2520 = vmatprep.subr.bf16.mxu0 %v1953
    %2521 = vmatpush2.bf16.msra.mxu0 %v1952
    %2522 = vmatprep.subr.bf16.mxu0 %v1945
    %2523 = vmatpush2.bf16.msra.mxu0 %v1944
    %2524 = vmatprep.subr.bf16.mxu0 %v1937
    %2525 = vmatpush2.bf16.msra.mxu0 %v1936
    %2526 = vmatprep.subr.bf16.mxu0 %v1929
    %2527 = vmatpush2.bf16.msra.mxu0 %v1928
    %2528 = vmatprep.subr.bf16.mxu0 %v1921
    %2529 = vmatpush2.bf16.msra.mxu0 %v1920
    %2530 = vmatprep.subr.bf16.mxu0 %v1913
    %2531 = vmatpush2.bf16.msra.mxu0 %v1912
    %2532 = vmatprep.subr.bf16.mxu0 %v1905
    %2533 = vmatpush2.bf16.msra.mxu0 %v1904
    %2534 = vmatprep.subr.bf16.mxu0 %v1897
    %2535 = vmatpush2.bf16.msra.mxu0 %v1896
    %2536 = vmatprep.mubr.bf16.mxu0 %v759
    %2537 = vmatmul.mubr.bf16.gmra.mxu0 %v758
    %v2538 = vpop.f32.mrf.mxu0
    %v2539 = vadd.f32 %v1039, %v2538
    %v2540 = vpop.f32.mrf.mxu0
    %v2541 = vadd.f32 %v1043, %v2540
    %v2542 = vpop.f32.mrf.mxu0
    %v2543 = vpop.f32.mrf.mxu0
    %2544 = vdwg.mxu0
    %2545 = vmatprep.subr.bf16.mxu0 %v2017
    %2546 = vmatpush1.bf16.msra.mxu0 %v2016
    %2547 = vmatprep.subr.bf16.mxu0 %v2009
    %2548 = vmatpush1.bf16.msra.mxu0 %v2008
    %2549 = vmatprep.subr.bf16.mxu0 %v2001
    %2550 = vmatpush1.bf16.msra.mxu0 %v2000
    %2551 = vmatprep.subr.bf16.mxu0 %v1993
    %2552 = vmatpush1.bf16.msra.mxu0 %v1992
    %2553 = vmatprep.subr.bf16.mxu0 %v1985
    %2554 = vmatpush1.bf16.msra.mxu0 %v1984
    %2555 = vmatprep.subr.bf16.mxu0 %v1977
    %2556 = vmatpush1.bf16.msra.mxu0 %v1976
    %2557 = vmatprep.subr.bf16.mxu0 %v1969
    %2558 = vmatpush1.bf16.msra.mxu0 %v1968
    %2559 = vmatprep.subr.bf16.mxu0 %v1961
    %2560 = vmatpush1.bf16.msra.mxu0 %v1960
    %2561 = vmatprep.subr.bf16.mxu0 %v2081
    %2562 = vmatpush2.bf16.msra.mxu0 %v2080
    %2563 = vmatprep.subr.bf16.mxu0 %v2073
    %2564 = vmatpush2.bf16.msra.mxu0 %v2072
    %2565 = vmatprep.subr.bf16.mxu0 %v2065
    %2566 = vmatpush2.bf16.msra.mxu0 %v2064
    %2567 = vmatprep.subr.bf16.mxu0 %v2057
    %2568 = vmatpush2.bf16.msra.mxu0 %v2056
    %2569 = vmatprep.subr.bf16.mxu0 %v2049
    %2570 = vmatpush2.bf16.msra.mxu0 %v2048
    %2571 = vmatprep.subr.bf16.mxu0 %v2041
    %2572 = vmatpush2.bf16.msra.mxu0 %v2040
    %2573 = vmatprep.subr.bf16.mxu0 %v2033
    %2574 = vmatpush2.bf16.msra.mxu0 %v2032
    %2575 = vmatprep.subr.bf16.mxu0 %v2025
    %2576 = vmatpush2.bf16.msra.mxu0 %v2024
    %2577 = vmatprep.mubr.bf16.mxu0 %v761
    %2578 = vmatmul.mubr.bf16.gmra.mxu0 %v760
    %v2579 = vpop.f32.mrf.mxu0
    %v2580 = vadd.f32 %v2539, %v2579
    %v2581 = vpop.f32.mrf.mxu0
    %v2582 = vadd.f32 %v2541, %v2581
    %v2583 = vpop.f32.mrf.mxu0
    %v2584 = vpop.f32.mrf.mxu0
    %2585 = vdwg.mxu0
    %2586 = vmatprep.subr.bf16.mxu0 %v1891
    %2587 = vmatpush1.bf16.msra.mxu0 %v1890
    %2588 = vmatprep.subr.bf16.mxu0 %v1883
    %2589 = vmatpush1.bf16.msra.mxu0 %v1882
    %2590 = vmatprep.subr.bf16.mxu0 %v1875
    %2591 = vmatpush1.bf16.msra.mxu0 %v1874
    %2592 = vmatprep.subr.bf16.mxu0 %v1867
    %2593 = vmatpush1.bf16.msra.mxu0 %v1866
    %2594 = vmatprep.subr.bf16.mxu0 %v1859
    %2595 = vmatpush1.bf16.msra.mxu0 %v1858
    %2596 = vmatprep.subr.bf16.mxu0 %v1851
    %2597 = vmatpush1.bf16.msra.mxu0 %v1850
    %2598 = vmatprep.subr.bf16.mxu0 %v1843
    %2599 = vmatpush1.bf16.msra.mxu0 %v1842
    %2600 = vmatprep.subr.bf16.mxu0 %v1835
    %2601 = vmatpush1.bf16.msra.mxu0 %v1834
    %2602 = vmatprep.subr.bf16.mxu0 %v1955
    %2603 = vmatpush2.bf16.msra.mxu0 %v1954
    %2604 = vmatprep.subr.bf16.mxu0 %v1947
    %2605 = vmatpush2.bf16.msra.mxu0 %v1946
    %2606 = vmatprep.subr.bf16.mxu0 %v1939
    %2607 = vmatpush2.bf16.msra.mxu0 %v1938
    %2608 = vmatprep.subr.bf16.mxu0 %v1931
    %2609 = vmatpush2.bf16.msra.mxu0 %v1930
    %2610 = vmatprep.subr.bf16.mxu0 %v1923
    %2611 = vmatpush2.bf16.msra.mxu0 %v1922
    %2612 = vmatprep.subr.bf16.mxu0 %v1915
    %2613 = vmatpush2.bf16.msra.mxu0 %v1914
    %2614 = vmatprep.subr.bf16.mxu0 %v1907
    %2615 = vmatpush2.bf16.msra.mxu0 %v1906
    %2616 = vmatprep.subr.bf16.mxu0 %v1899
    %2617 = vmatpush2.bf16.msra.mxu0 %v1898
    %2618 = vmatprep.mubr.bf16.mxu0 %v759
    %2619 = vmatmul.mubr.bf16.gmra.mxu0 %v758
    %v2620 = vpop.f32.mrf.mxu0
    %v2621 = vadd.f32 %v1047, %v2620
    %v2622 = vpop.f32.mrf.mxu0
    %v2623 = vadd.f32 %v1051, %v2622
    %v2624 = vpop.f32.mrf.mxu0
    %v2625 = vpop.f32.mrf.mxu0
    %2626 = vdwg.mxu0
    %2627 = vmatprep.subr.bf16.mxu0 %v2019
    %2628 = vmatpush1.bf16.msra.mxu0 %v2018
    %2629 = vmatprep.subr.bf16.mxu0 %v2011
    %2630 = vmatpush1.bf16.msra.mxu0 %v2010
    %2631 = vmatprep.subr.bf16.mxu0 %v2003
    %2632 = vmatpush1.bf16.msra.mxu0 %v2002
    %2633 = vmatprep.subr.bf16.mxu0 %v1995
    %2634 = vmatpush1.bf16.msra.mxu0 %v1994
    %2635 = vmatprep.subr.bf16.mxu0 %v1987
    %2636 = vmatpush1.bf16.msra.mxu0 %v1986
    %2637 = vmatprep.subr.bf16.mxu0 %v1979
    %2638 = vmatpush1.bf16.msra.mxu0 %v1978
    %2639 = vmatprep.subr.bf16.mxu0 %v1971
    %2640 = vmatpush1.bf16.msra.mxu0 %v1970
    %2641 = vmatprep.subr.bf16.mxu0 %v1963
    %2642 = vmatpush1.bf16.msra.mxu0 %v1962
    %2643 = vmatprep.subr.bf16.mxu0 %v2083
    %2644 = vmatpush2.bf16.msra.mxu0 %v2082
    %2645 = vmatprep.subr.bf16.mxu0 %v2075
    %2646 = vmatpush2.bf16.msra.mxu0 %v2074
    %2647 = vmatprep.subr.bf16.mxu0 %v2067
    %2648 = vmatpush2.bf16.msra.mxu0 %v2066
    %2649 = vmatprep.subr.bf16.mxu0 %v2059
    %2650 = vmatpush2.bf16.msra.mxu0 %v2058
    %2651 = vmatprep.subr.bf16.mxu0 %v2051
    %2652 = vmatpush2.bf16.msra.mxu0 %v2050
    %2653 = vmatprep.subr.bf16.mxu0 %v2043
    %2654 = vmatpush2.bf16.msra.mxu0 %v2042
    %2655 = vmatprep.subr.bf16.mxu0 %v2035
    %2656 = vmatpush2.bf16.msra.mxu0 %v2034
    %2657 = vmatprep.subr.bf16.mxu0 %v2027
    %2658 = vmatpush2.bf16.msra.mxu0 %v2026
    %2659 = vmatprep.mubr.bf16.mxu0 %v761
    %2660 = vmatmul.mubr.bf16.gmra.mxu0 %v760
    %v2661 = vpop.f32.mrf.mxu0
    %v2662 = vadd.f32 %v2621, %v2661
    %v2663 = vpop.f32.mrf.mxu0
    %v2664 = vadd.f32 %v2623, %v2663
    %v2665 = vpop.f32.mrf.mxu0
    %v2666 = vpop.f32.mrf.mxu0
    %2667 = vdwg.mxu0
    %v2668 = vpack.c.bf16 %v2416, %v2416
    %v2669 = vpack.c.bf16 %v2418, %v2418
    %v2670 = vpack.c.bf16 %v2498, %v2498
    %v2671 = vpack.c.bf16 %v2500, %v2500
    %v2672 = vpack.c.bf16 %v2580, %v2580
    %v2673 = vpack.c.bf16 %v2582, %v2582
    %v2674 = vpack.c.bf16 %v2662, %v2662
    %v2675 = vpack.c.bf16 %v2664, %v2664
    %v2676 = vmax.bf16 %v2668, 0
    %v2677 = vmax.bf16 %v2669, 0
    %v2678 = vmax.bf16 %v2670, 0
    %v2679 = vmax.bf16 %v2671, 0
    %v2680 = vmax.bf16 %v2672, 0
    %v2681 = vmax.bf16 %v2673, 0
    %v2682 = vmax.bf16 %v2674, 0
    %v2683 = vmax.bf16 %v2675, 0
    %v2684 = vld [vmem:[#allocation13] sm:$0xf]
    %v2685 = vld [vmem:[#allocation13 + $0x4] sm:$0xf]
    %v2686 = vld [vmem:[#allocation13 + $0x8] sm:$0xf]
    %v2687 = vld [vmem:[#allocation13 + $0xc] sm:$0xf]
    %v2688 = vld [vmem:[#allocation13 + $0x10] sm:$0xf]
    %v2689 = vld [vmem:[#allocation13 + $0x14] sm:$0xf]
    %v2690 = vld [vmem:[#allocation13 + $0x18] sm:$0xf]
    %v2691 = vld [vmem:[#allocation13 + $0x1c] sm:$0xf]
    %v2692 = vld [vmem:[#allocation13 + $0x20] sm:$0xf]
    %v2693 = vld [vmem:[#allocation13 + $0x24] sm:$0xf]
    %v2694 = vld [vmem:[#allocation13 + $0x28] sm:$0xf]
    %v2695 = vld [vmem:[#allocation13 + $0x2c] sm:$0xf]
    %v2696 = vld [vmem:[#allocation13 + $0x30] sm:$0xf]
    %v2697 = vld [vmem:[#allocation13 + $0x34] sm:$0xf]
    %v2698 = vld [vmem:[#allocation13 + $0x38] sm:$0xf]
    %v2699 = vld [vmem:[#allocation13 + $0x3c] sm:$0xf]
    %v2700 = vld [vmem:[#allocation13 + $0x40] sm:$0xf]
    %v2701 = vld [vmem:[#allocation13 + $0x44] sm:$0xf]
    %v2702 = vld [vmem:[#allocation13 + $0x48] sm:$0xf]
    %v2703 = vld [vmem:[#allocation13 + $0x4c] sm:$0xf]
    %v2704 = vld [vmem:[#allocation13 + $0x50] sm:$0xf]
    %v2705 = vld [vmem:[#allocation13 + $0x54] sm:$0xf]
    %v2706 = vld [vmem:[#allocation13 + $0x58] sm:$0xf]
    %v2707 = vld [vmem:[#allocation13 + $0x5c] sm:$0xf]
    %v2708 = vld [vmem:[#allocation13 + $0x60] sm:$0xf]
    %v2709 = vld [vmem:[#allocation13 + $0x64] sm:$0xf]
    %v2710 = vld [vmem:[#allocation13 + $0x68] sm:$0xf]
    %v2711 = vld [vmem:[#allocation13 + $0x6c] sm:$0xf]
    %v2712 = vld [vmem:[#allocation13 + $0x70] sm:$0xf]
    %v2713 = vld [vmem:[#allocation13 + $0x74] sm:$0xf]
    %v2714 = vld [vmem:[#allocation13 + $0x78] sm:$0xf]
    %v2715 = vld [vmem:[#allocation13 + $0x7c] sm:$0xf]
    %v2716 = vld [vmem:[#allocation13 + $0x80] sm:$0xf]
    %v2717 = vld [vmem:[#allocation13 + $0x84] sm:$0xf]
    %v2718 = vld [vmem:[#allocation13 + $0x88] sm:$0xf]
    %v2719 = vld [vmem:[#allocation13 + $0x8c] sm:$0xf]
    %v2720 = vld [vmem:[#allocation13 + $0x90] sm:$0xf]
    %v2721 = vld [vmem:[#allocation13 + $0x94] sm:$0xf]
    %v2722 = vld [vmem:[#allocation13 + $0x98] sm:$0xf]
    %v2723 = vld [vmem:[#allocation13 + $0x9c] sm:$0xf]
    %v2724 = vld [vmem:[#allocation13 + $0xa0] sm:$0xf]
    %v2725 = vld [vmem:[#allocation13 + $0xa4] sm:$0xf]
    %v2726 = vld [vmem:[#allocation13 + $0xa8] sm:$0xf]
    %v2727 = vld [vmem:[#allocation13 + $0xac] sm:$0xf]
    %v2728 = vld [vmem:[#allocation13 + $0xb0] sm:$0xf]
    %v2729 = vld [vmem:[#allocation13 + $0xb4] sm:$0xf]
    %v2730 = vld [vmem:[#allocation13 + $0xb8] sm:$0xf]
    %v2731 = vld [vmem:[#allocation13 + $0xbc] sm:$0xf]
    %v2732 = vld [vmem:[#allocation13 + $0xc0] sm:$0xf]
    %v2733 = vld [vmem:[#allocation13 + $0xc4] sm:$0xf]
    %v2734 = vld [vmem:[#allocation13 + $0xc8] sm:$0xf]
    %v2735 = vld [vmem:[#allocation13 + $0xcc] sm:$0xf]
    %v2736 = vld [vmem:[#allocation13 + $0xd0] sm:$0xf]
    %v2737 = vld [vmem:[#allocation13 + $0xd4] sm:$0xf]
    %v2738 = vld [vmem:[#allocation13 + $0xd8] sm:$0xf]
    %v2739 = vld [vmem:[#allocation13 + $0xdc] sm:$0xf]
    %v2740 = vld [vmem:[#allocation13 + $0xe0] sm:$0xf]
    %v2741 = vld [vmem:[#allocation13 + $0xe4] sm:$0xf]
    %v2742 = vld [vmem:[#allocation13 + $0xe8] sm:$0xf]
    %v2743 = vld [vmem:[#allocation13 + $0xec] sm:$0xf]
    %v2744 = vld [vmem:[#allocation13 + $0xf0] sm:$0xf]
    %v2745 = vld [vmem:[#allocation13 + $0xf4] sm:$0xf]
    %v2746 = vld [vmem:[#allocation13 + $0xf8] sm:$0xf]
    %v2747 = vld [vmem:[#allocation13 + $0xfc] sm:$0xf]
    %v2748 = vld [vmem:[#allocation13 + $0x100] sm:$0xf]
    %v2749 = vld [vmem:[#allocation13 + $0x104] sm:$0xf]
    %v2750 = vld [vmem:[#allocation13 + $0x108] sm:$0xf]
    %v2751 = vld [vmem:[#allocation13 + $0x10c] sm:$0xf]
    %v2752 = vld [vmem:[#allocation13 + $0x110] sm:$0xf]
    %v2753 = vld [vmem:[#allocation13 + $0x114] sm:$0xf]
    %v2754 = vld [vmem:[#allocation13 + $0x118] sm:$0xf]
    %v2755 = vld [vmem:[#allocation13 + $0x11c] sm:$0xf]
    %v2756 = vld [vmem:[#allocation13 + $0x120] sm:$0xf]
    %v2757 = vld [vmem:[#allocation13 + $0x124] sm:$0xf]
    %v2758 = vld [vmem:[#allocation13 + $0x128] sm:$0xf]
    %v2759 = vld [vmem:[#allocation13 + $0x12c] sm:$0xf]
    %v2760 = vld [vmem:[#allocation13 + $0x130] sm:$0xf]
    %v2761 = vld [vmem:[#allocation13 + $0x134] sm:$0xf]
    %v2762 = vld [vmem:[#allocation13 + $0x138] sm:$0xf]
    %v2763 = vld [vmem:[#allocation13 + $0x13c] sm:$0xf]
    %v2764 = vld [vmem:[#allocation13 + $0x140] sm:$0xf]
    %v2765 = vld [vmem:[#allocation13 + $0x144] sm:$0xf]
    %v2766 = vld [vmem:[#allocation13 + $0x148] sm:$0xf]
    %v2767 = vld [vmem:[#allocation13 + $0x14c] sm:$0xf]
    %v2768 = vld [vmem:[#allocation13 + $0x150] sm:$0xf]
    %v2769 = vld [vmem:[#allocation13 + $0x154] sm:$0xf]
    %v2770 = vld [vmem:[#allocation13 + $0x158] sm:$0xf]
    %v2771 = vld [vmem:[#allocation13 + $0x15c] sm:$0xf]
    %v2772 = vld [vmem:[#allocation13 + $0x160] sm:$0xf]
    %v2773 = vld [vmem:[#allocation13 + $0x164] sm:$0xf]
    %v2774 = vld [vmem:[#allocation13 + $0x168] sm:$0xf]
    %v2775 = vld [vmem:[#allocation13 + $0x16c] sm:$0xf]
    %v2776 = vld [vmem:[#allocation13 + $0x170] sm:$0xf]
    %v2777 = vld [vmem:[#allocation13 + $0x174] sm:$0xf]
    %v2778 = vld [vmem:[#allocation13 + $0x178] sm:$0xf]
    %v2779 = vld [vmem:[#allocation13 + $0x17c] sm:$0xf]
    %v2780 = vld [vmem:[#allocation13 + $0x180] sm:$0xf]
    %v2781 = vld [vmem:[#allocation13 + $0x184] sm:$0xf]
    %v2782 = vld [vmem:[#allocation13 + $0x188] sm:$0xf]
    %v2783 = vld [vmem:[#allocation13 + $0x18c] sm:$0xf]
    %v2784 = vld [vmem:[#allocation13 + $0x190] sm:$0xf]
    %v2785 = vld [vmem:[#allocation13 + $0x194] sm:$0xf]
    %v2786 = vld [vmem:[#allocation13 + $0x198] sm:$0xf]
    %v2787 = vld [vmem:[#allocation13 + $0x19c] sm:$0xf]
    %v2788 = vld [vmem:[#allocation13 + $0x1a0] sm:$0xf]
    %v2789 = vld [vmem:[#allocation13 + $0x1a4] sm:$0xf]
    %v2790 = vld [vmem:[#allocation13 + $0x1a8] sm:$0xf]
    %v2791 = vld [vmem:[#allocation13 + $0x1ac] sm:$0xf]
    %v2792 = vld [vmem:[#allocation13 + $0x1b0] sm:$0xf]
    %v2793 = vld [vmem:[#allocation13 + $0x1b4] sm:$0xf]
    %v2794 = vld [vmem:[#allocation13 + $0x1b8] sm:$0xf]
    %v2795 = vld [vmem:[#allocation13 + $0x1bc] sm:$0xf]
    %v2796 = vld [vmem:[#allocation13 + $0x1c0] sm:$0xf]
    %v2797 = vld [vmem:[#allocation13 + $0x1c4] sm:$0xf]
    %v2798 = vld [vmem:[#allocation13 + $0x1c8] sm:$0xf]
    %v2799 = vld [vmem:[#allocation13 + $0x1cc] sm:$0xf]
    %v2800 = vld [vmem:[#allocation13 + $0x1d0] sm:$0xf]
    %v2801 = vld [vmem:[#allocation13 + $0x1d4] sm:$0xf]
    %v2802 = vld [vmem:[#allocation13 + $0x1d8] sm:$0xf]
    %v2803 = vld [vmem:[#allocation13 + $0x1dc] sm:$0xf]
    %v2804 = vld [vmem:[#allocation13 + $0x1e0] sm:$0xf]
    %v2805 = vld [vmem:[#allocation13 + $0x1e4] sm:$0xf]
    %v2806 = vld [vmem:[#allocation13 + $0x1e8] sm:$0xf]
    %v2807 = vld [vmem:[#allocation13 + $0x1ec] sm:$0xf]
    %v2808 = vld [vmem:[#allocation13 + $0x1f0] sm:$0xf]
    %v2809 = vld [vmem:[#allocation13 + $0x1f4] sm:$0xf]
    %v2810 = vld [vmem:[#allocation13 + $0x1f8] sm:$0xf]
    %v2811 = vld [vmem:[#allocation13 + $0x1fc] sm:$0xf]
    %v2812 = vld [vmem:[%s10] sm:$0x1]
    %v2814 = vlaneseq
    %v2815 = vshrl.u32 %v2814, 7
    %v2816 = vsub.s32 0, %v2815
    %v2817 = vrot.slane %v2812, %v2816
    %v2947 = vunpack.c.l.b16 %v2684
    %v2948 = vunpack.c.l.b16 %v2685
    %v2949 = vunpack.c.l.b16 %v2686
    %v2950 = vunpack.c.l.b16 %v2687
    %v2951 = vunpack.c.l.b16 %v2688
    %v2952 = vunpack.c.l.b16 %v2689
    %v2953 = vunpack.c.l.b16 %v2690
    %v2954 = vunpack.c.l.b16 %v2691
    %v2955 = vunpack.c.l.b16 %v2692
    %v2956 = vunpack.c.l.b16 %v2693
    %v2957 = vunpack.c.l.b16 %v2694
    %v2958 = vunpack.c.l.b16 %v2695
    %v2959 = vunpack.c.l.b16 %v2696
    %v2960 = vunpack.c.l.b16 %v2697
    %v2961 = vunpack.c.l.b16 %v2698
    %v2962 = vunpack.c.l.b16 %v2699
    %v2963 = vunpack.c.l.b16 %v2700
    %v2964 = vunpack.c.l.b16 %v2701
    %v2965 = vunpack.c.l.b16 %v2702
    %v2966 = vunpack.c.l.b16 %v2703
    %v2967 = vunpack.c.l.b16 %v2704
    %v2968 = vunpack.c.l.b16 %v2705
    %v2969 = vunpack.c.l.b16 %v2706
    %v2970 = vunpack.c.l.b16 %v2707
    %v2971 = vunpack.c.l.b16 %v2708
    %v2972 = vunpack.c.l.b16 %v2709
    %v2973 = vunpack.c.l.b16 %v2710
    %v2974 = vunpack.c.l.b16 %v2711
    %v2975 = vunpack.c.l.b16 %v2712
    %v2976 = vunpack.c.l.b16 %v2713
    %v2977 = vunpack.c.l.b16 %v2714
    %v2978 = vunpack.c.l.b16 %v2715
    %v2979 = vunpack.c.l.b16 %v2716
    %v2980 = vunpack.c.l.b16 %v2717
    %v2981 = vunpack.c.l.b16 %v2718
    %v2982 = vunpack.c.l.b16 %v2719
    %v2983 = vunpack.c.l.b16 %v2720
    %v2984 = vunpack.c.l.b16 %v2721
    %v2985 = vunpack.c.l.b16 %v2722
    %v2986 = vunpack.c.l.b16 %v2723
    %v2987 = vunpack.c.l.b16 %v2724
    %v2988 = vunpack.c.l.b16 %v2725
    %v2989 = vunpack.c.l.b16 %v2726
    %v2990 = vunpack.c.l.b16 %v2727
    %v2991 = vunpack.c.l.b16 %v2728
    %v2992 = vunpack.c.l.b16 %v2729
    %v2993 = vunpack.c.l.b16 %v2730
    %v2994 = vunpack.c.l.b16 %v2731
    %v2995 = vunpack.c.l.b16 %v2732
    %v2996 = vunpack.c.l.b16 %v2733
    %v2997 = vunpack.c.l.b16 %v2734
    %v2998 = vunpack.c.l.b16 %v2735
    %v2999 = vunpack.c.l.b16 %v2736
    %v3000 = vunpack.c.l.b16 %v2737
    %v3001 = vunpack.c.l.b16 %v2738
    %v3002 = vunpack.c.l.b16 %v2739
    %v3003 = vunpack.c.l.b16 %v2740
    %v3004 = vunpack.c.l.b16 %v2741
    %v3005 = vunpack.c.l.b16 %v2742
    %v3006 = vunpack.c.l.b16 %v2743
    %v3007 = vunpack.c.l.b16 %v2744
    %v3008 = vunpack.c.l.b16 %v2745
    %v3009 = vunpack.c.l.b16 %v2746
    %v3010 = vunpack.c.l.b16 %v2747
    %v3011 = vunpack.c.l.b16 %v2748
    %v3012 = vunpack.c.l.b16 %v2749
    %v3013 = vunpack.c.l.b16 %v2750
    %v3014 = vunpack.c.l.b16 %v2751
    %v3015 = vunpack.c.l.b16 %v2752
    %v3016 = vunpack.c.l.b16 %v2753
    %v3017 = vunpack.c.l.b16 %v2754
    %v3018 = vunpack.c.l.b16 %v2755
    %v3019 = vunpack.c.l.b16 %v2756
    %v3020 = vunpack.c.l.b16 %v2757
    %v3021 = vunpack.c.l.b16 %v2758
    %v3022 = vunpack.c.l.b16 %v2759
    %v3023 = vunpack.c.l.b16 %v2760
    %v3024 = vunpack.c.l.b16 %v2761
    %v3025 = vunpack.c.l.b16 %v2762
    %v3026 = vunpack.c.l.b16 %v2763
    %v3027 = vunpack.c.l.b16 %v2764
    %v3028 = vunpack.c.l.b16 %v2765
    %v3029 = vunpack.c.l.b16 %v2766
    %v3030 = vunpack.c.l.b16 %v2767
    %v3031 = vunpack.c.l.b16 %v2768
    %v3032 = vunpack.c.l.b16 %v2769
    %v3033 = vunpack.c.l.b16 %v2770
    %v3034 = vunpack.c.l.b16 %v2771
    %v3035 = vunpack.c.l.b16 %v2772
    %v3036 = vunpack.c.l.b16 %v2773
    %v3037 = vunpack.c.l.b16 %v2774
    %v3038 = vunpack.c.l.b16 %v2775
    %v3039 = vunpack.c.l.b16 %v2776
    %v3040 = vunpack.c.l.b16 %v2777
    %v3041 = vunpack.c.l.b16 %v2778
    %v3042 = vunpack.c.l.b16 %v2779
    %v3043 = vunpack.c.l.b16 %v2780
    %v3044 = vunpack.c.l.b16 %v2781
    %v3045 = vunpack.c.l.b16 %v2782
    %v3046 = vunpack.c.l.b16 %v2783
    %v3047 = vunpack.c.l.b16 %v2784
    %v3048 = vunpack.c.l.b16 %v2785
    %v3049 = vunpack.c.l.b16 %v2786
    %v3050 = vunpack.c.l.b16 %v2787
    %v3051 = vunpack.c.l.b16 %v2788
    %v3052 = vunpack.c.l.b16 %v2789
    %v3053 = vunpack.c.l.b16 %v2790
    %v3054 = vunpack.c.l.b16 %v2791
    %v3055 = vunpack.c.l.b16 %v2792
    %v3056 = vunpack.c.l.b16 %v2793
    %v3057 = vunpack.c.l.b16 %v2794
    %v3058 = vunpack.c.l.b16 %v2795
    %v3059 = vunpack.c.l.b16 %v2796
    %v3060 = vunpack.c.l.b16 %v2797
    %v3061 = vunpack.c.l.b16 %v2798
    %v3062 = vunpack.c.l.b16 %v2799
    %v3063 = vunpack.c.l.b16 %v2800
    %v3064 = vunpack.c.l.b16 %v2801
    %v3065 = vunpack.c.l.b16 %v2802
    %v3066 = vunpack.c.l.b16 %v2803
    %v3067 = vunpack.c.l.b16 %v2804
    %v3068 = vunpack.c.l.b16 %v2805
    %v3069 = vunpack.c.l.b16 %v2806
    %v3070 = vunpack.c.l.b16 %v2807
    %v3071 = vunpack.c.l.b16 %v2808
    %v3072 = vunpack.c.l.b16 %v2809
    %v3073 = vunpack.c.l.b16 %v2810
    %v3074 = vunpack.c.l.b16 %v2811
    %v3075 = vpack.c.b16 %v2948, %v2947
    %v3076 = vpack.c.b16 %v2950, %v2949
    %v3077 = vpack.c.b16 %v2952, %v2951
    %v3078 = vpack.c.b16 %v2954, %v2953
    %v3079 = vpack.c.b16 %v2956, %v2955
    %v3080 = vpack.c.b16 %v2958, %v2957
    %v3081 = vpack.c.b16 %v2960, %v2959
    %v3082 = vpack.c.b16 %v2962, %v2961
    %v3083 = vpack.c.b16 %v2964, %v2963
    %v3084 = vpack.c.b16 %v2966, %v2965
    %v3085 = vpack.c.b16 %v2968, %v2967
    %v3086 = vpack.c.b16 %v2970, %v2969
    %v3087 = vpack.c.b16 %v2972, %v2971
    %v3088 = vpack.c.b16 %v2974, %v2973
    %v3089 = vpack.c.b16 %v2976, %v2975
    %v3090 = vpack.c.b16 %v2978, %v2977
    %v3091 = vpack.c.b16 %v2980, %v2979
    %v3092 = vpack.c.b16 %v2982, %v2981
    %v3093 = vpack.c.b16 %v2984, %v2983
    %v3094 = vpack.c.b16 %v2986, %v2985
    %v3095 = vpack.c.b16 %v2988, %v2987
    %v3096 = vpack.c.b16 %v2990, %v2989
    %v3097 = vpack.c.b16 %v2992, %v2991
    %v3098 = vpack.c.b16 %v2994, %v2993
    %v3099 = vpack.c.b16 %v2996, %v2995
    %v3100 = vpack.c.b16 %v2998, %v2997
    %v3101 = vpack.c.b16 %v3000, %v2999
    %v3102 = vpack.c.b16 %v3002, %v3001
    %v3103 = vpack.c.b16 %v3004, %v3003
    %v3104 = vpack.c.b16 %v3006, %v3005
    %v3105 = vpack.c.b16 %v3008, %v3007
    %v3106 = vpack.c.b16 %v3010, %v3009
    %v3107 = vpack.c.b16 %v3012, %v3011
    %v3108 = vpack.c.b16 %v3014, %v3013
    %v3109 = vpack.c.b16 %v3016, %v3015
    %v3110 = vpack.c.b16 %v3018, %v3017
    %v3111 = vpack.c.b16 %v3020, %v3019
    %v3112 = vpack.c.b16 %v3022, %v3021
    %v3113 = vpack.c.b16 %v3024, %v3023
    %v3114 = vpack.c.b16 %v3026, %v3025
    %v3115 = vpack.c.b16 %v3028, %v3027
    %v3116 = vpack.c.b16 %v3030, %v3029
    %v3117 = vpack.c.b16 %v3032, %v3031
    %v3118 = vpack.c.b16 %v3034, %v3033
    %v3119 = vpack.c.b16 %v3036, %v3035
    %v3120 = vpack.c.b16 %v3038, %v3037
    %v3121 = vpack.c.b16 %v3040, %v3039
    %v3122 = vpack.c.b16 %v3042, %v3041
    %v3123 = vpack.c.b16 %v3044, %v3043
    %v3124 = vpack.c.b16 %v3046, %v3045
    %v3125 = vpack.c.b16 %v3048, %v3047
    %v3126 = vpack.c.b16 %v3050, %v3049
    %v3127 = vpack.c.b16 %v3052, %v3051
    %v3128 = vpack.c.b16 %v3054, %v3053
    %v3129 = vpack.c.b16 %v3056, %v3055
    %v3130 = vpack.c.b16 %v3058, %v3057
    %v3131 = vpack.c.b16 %v3060, %v3059
    %v3132 = vpack.c.b16 %v3062, %v3061
    %v3133 = vpack.c.b16 %v3064, %v3063
    %v3134 = vpack.c.b16 %v3066, %v3065
    %v3135 = vpack.c.b16 %v3068, %v3067
    %v3136 = vpack.c.b16 %v3070, %v3069
    %v3137 = vpack.c.b16 %v3072, %v3071
    %v3138 = vpack.c.b16 %v3074, %v3073
    %3203 = vmatprep.subr.bf16.mxu0 0
    %3204 = vmatpush1.bf16.msra.mxu0 %v3082
    %3205 = vmatprep.subr.bf16.mxu0 0
    %3206 = vmatpush1.bf16.msra.mxu0 %v3081
    %3207 = vmatprep.subr.bf16.mxu0 0
    %3208 = vmatpush1.bf16.msra.mxu0 %v3080
    %3209 = vmatprep.subr.bf16.mxu0 0
    %3210 = vmatpush1.bf16.msra.mxu0 %v3079
    %3211 = vmatprep.subr.bf16.mxu0 0
    %3212 = vmatpush1.bf16.msra.mxu0 %v3078
    %3213 = vmatprep.subr.bf16.mxu0 0
    %3214 = vmatpush1.bf16.msra.mxu0 %v3077
    %3215 = vmatprep.subr.bf16.mxu0 0
    %3216 = vmatpush1.bf16.msra.mxu0 %v3076
    %3217 = vmatprep.subr.bf16.mxu0 0
    %3218 = vmatpush1.bf16.msra.mxu0 %v3075
    %3219 = vmatprep.subr.bf16.mxu0 0
    %3220 = vmatpush2.bf16.msra.mxu0 %v3090
    %3221 = vmatprep.subr.bf16.mxu0 0
    %3222 = vmatpush2.bf16.msra.mxu0 %v3089
    %3223 = vmatprep.subr.bf16.mxu0 0
    %3224 = vmatpush2.bf16.msra.mxu0 %v3088
    %3225 = vmatprep.subr.bf16.mxu0 0
    %3226 = vmatpush2.bf16.msra.mxu0 %v3087
    %3227 = vmatprep.subr.bf16.mxu0 0
    %3228 = vmatpush2.bf16.msra.mxu0 %v3086
    %3229 = vmatprep.subr.bf16.mxu0 0
    %3230 = vmatpush2.bf16.msra.mxu0 %v3085
    %3231 = vmatprep.subr.bf16.mxu0 0
    %3232 = vmatpush2.bf16.msra.mxu0 %v3084
    %3233 = vmatprep.subr.bf16.mxu0 0
    %3234 = vmatpush2.bf16.msra.mxu0 %v3083
    %3235 = vmatprep.mubr.bf16.mxu0 %v2677
    %3236 = vmatmul.mubr.bf16.gmra.mxu0 %v2676
    %v3237 = vpop.f32.mrf.mxu0
    %v3238 = vadd.f32 %v2817, %v3237
    %v3239 = vpop.f32.mrf.mxu0
    %v3240 = vpop.f32.mrf.mxu0
    %v3241 = vpop.f32.mrf.mxu0
    %3242 = vdwg.mxu0
    %3243 = vmatprep.subr.bf16.mxu0 0
    %3244 = vmatpush1.bf16.msra.mxu0 %v3098
    %3245 = vmatprep.subr.bf16.mxu0 0
    %3246 = vmatpush1.bf16.msra.mxu0 %v3097
    %3247 = vmatprep.subr.bf16.mxu0 0
    %3248 = vmatpush1.bf16.msra.mxu0 %v3096
    %3249 = vmatprep.subr.bf16.mxu0 0
    %3250 = vmatpush1.bf16.msra.mxu0 %v3095
    %3251 = vmatprep.subr.bf16.mxu0 0
    %3252 = vmatpush1.bf16.msra.mxu0 %v3094
    %3253 = vmatprep.subr.bf16.mxu0 0
    %3254 = vmatpush1.bf16.msra.mxu0 %v3093
    %3255 = vmatprep.subr.bf16.mxu0 0
    %3256 = vmatpush1.bf16.msra.mxu0 %v3092
    %3257 = vmatprep.subr.bf16.mxu0 0
    %3258 = vmatpush1.bf16.msra.mxu0 %v3091
    %3259 = vmatprep.subr.bf16.mxu0 0
    %3260 = vmatpush2.bf16.msra.mxu0 %v3106
    %3261 = vmatprep.subr.bf16.mxu0 0
    %3262 = vmatpush2.bf16.msra.mxu0 %v3105
    %3263 = vmatprep.subr.bf16.mxu0 0
    %3264 = vmatpush2.bf16.msra.mxu0 %v3104
    %3265 = vmatprep.subr.bf16.mxu0 0
    %3266 = vmatpush2.bf16.msra.mxu0 %v3103
    %3267 = vmatprep.subr.bf16.mxu0 0
    %3268 = vmatpush2.bf16.msra.mxu0 %v3102
    %3269 = vmatprep.subr.bf16.mxu0 0
    %3270 = vmatpush2.bf16.msra.mxu0 %v3101
    %3271 = vmatprep.subr.bf16.mxu0 0
    %3272 = vmatpush2.bf16.msra.mxu0 %v3100
    %3273 = vmatprep.subr.bf16.mxu0 0
    %3274 = vmatpush2.bf16.msra.mxu0 %v3099
    %3275 = vmatprep.mubr.bf16.mxu0 %v2679
    %3276 = vmatmul.mubr.bf16.gmra.mxu0 %v2678
    %v3277 = vpop.f32.mrf.mxu0
    %v3278 = vadd.f32 %v3238, %v3277
    %v3279 = vpop.f32.mrf.mxu0
    %v3280 = vpop.f32.mrf.mxu0
    %v3281 = vpop.f32.mrf.mxu0
    %3282 = vdwg.mxu0
    %3283 = vmatprep.subr.bf16.mxu0 0
    %3284 = vmatpush1.bf16.msra.mxu0 %v3114
    %3285 = vmatprep.subr.bf16.mxu0 0
    %3286 = vmatpush1.bf16.msra.mxu0 %v3113
    %3287 = vmatprep.subr.bf16.mxu0 0
    %3288 = vmatpush1.bf16.msra.mxu0 %v3112
    %3289 = vmatprep.subr.bf16.mxu0 0
    %3290 = vmatpush1.bf16.msra.mxu0 %v3111
    %3291 = vmatprep.subr.bf16.mxu0 0
    %3292 = vmatpush1.bf16.msra.mxu0 %v3110
    %3293 = vmatprep.subr.bf16.mxu0 0
    %3294 = vmatpush1.bf16.msra.mxu0 %v3109
    %3295 = vmatprep.subr.bf16.mxu0 0
    %3296 = vmatpush1.bf16.msra.mxu0 %v3108
    %3297 = vmatprep.subr.bf16.mxu0 0
    %3298 = vmatpush1.bf16.msra.mxu0 %v3107
    %3299 = vmatprep.subr.bf16.mxu0 0
    %3300 = vmatpush2.bf16.msra.mxu0 %v3122
    %3301 = vmatprep.subr.bf16.mxu0 0
    %3302 = vmatpush2.bf16.msra.mxu0 %v3121
    %3303 = vmatprep.subr.bf16.mxu0 0
    %3304 = vmatpush2.bf16.msra.mxu0 %v3120
    %3305 = vmatprep.subr.bf16.mxu0 0
    %3306 = vmatpush2.bf16.msra.mxu0 %v3119
    %3307 = vmatprep.subr.bf16.mxu0 0
    %3308 = vmatpush2.bf16.msra.mxu0 %v3118
    %3309 = vmatprep.subr.bf16.mxu0 0
    %3310 = vmatpush2.bf16.msra.mxu0 %v3117
    %3311 = vmatprep.subr.bf16.mxu0 0
    %3312 = vmatpush2.bf16.msra.mxu0 %v3116
    %3313 = vmatprep.subr.bf16.mxu0 0
    %3314 = vmatpush2.bf16.msra.mxu0 %v3115
    %3315 = vmatprep.mubr.bf16.mxu0 %v2681
    %3316 = vmatmul.mubr.bf16.gmra.mxu0 %v2680
    %v3317 = vpop.f32.mrf.mxu0
    %v3318 = vadd.f32 %v3278, %v3317
    %v3319 = vpop.f32.mrf.mxu0
    %v3320 = vpop.f32.mrf.mxu0
    %v3321 = vpop.f32.mrf.mxu0
    %3322 = vdwg.mxu0
    %3323 = vmatprep.subr.bf16.mxu0 0
    %3324 = vmatpush1.bf16.msra.mxu0 %v3130
    %3325 = vmatprep.subr.bf16.mxu0 0
    %3326 = vmatpush1.bf16.msra.mxu0 %v3129
    %3327 = vmatprep.subr.bf16.mxu0 0
    %3328 = vmatpush1.bf16.msra.mxu0 %v3128
    %3329 = vmatprep.subr.bf16.mxu0 0
    %3330 = vmatpush1.bf16.msra.mxu0 %v3127
    %3331 = vmatprep.subr.bf16.mxu0 0
    %3332 = vmatpush1.bf16.msra.mxu0 %v3126
    %3333 = vmatprep.subr.bf16.mxu0 0
    %3334 = vmatpush1.bf16.msra.mxu0 %v3125
    %3335 = vmatprep.subr.bf16.mxu0 0
    %3336 = vmatpush1.bf16.msra.mxu0 %v3124
    %3337 = vmatprep.subr.bf16.mxu0 0
    %3338 = vmatpush1.bf16.msra.mxu0 %v3123
    %3339 = vmatprep.subr.bf16.mxu0 0
    %3340 = vmatpush2.bf16.msra.mxu0 %v3138
    %3341 = vmatprep.subr.bf16.mxu0 0
    %3342 = vmatpush2.bf16.msra.mxu0 %v3137
    %3343 = vmatprep.subr.bf16.mxu0 0
    %3344 = vmatpush2.bf16.msra.mxu0 %v3136
    %3345 = vmatprep.subr.bf16.mxu0 0
    %3346 = vmatpush2.bf16.msra.mxu0 %v3135
    %3347 = vmatprep.subr.bf16.mxu0 0
    %3348 = vmatpush2.bf16.msra.mxu0 %v3134
    %3349 = vmatprep.subr.bf16.mxu0 0
    %3350 = vmatpush2.bf16.msra.mxu0 %v3133
    %3351 = vmatprep.subr.bf16.mxu0 0
    %3352 = vmatpush2.bf16.msra.mxu0 %v3132
    %3353 = vmatprep.subr.bf16.mxu0 0
    %3354 = vmatpush2.bf16.msra.mxu0 %v3131
    %3355 = vmatprep.mubr.bf16.mxu0 %v2683
    %3356 = vmatmul.mubr.bf16.gmra.mxu0 %v2682
    %v3357 = vpop.f32.mrf.mxu0
    %v3358 = vadd.f32 %v3318, %v3357
    %v3359 = vpop.f32.mrf.mxu0
    %v3360 = vpop.f32.mrf.mxu0
    %v3361 = vpop.f32.mrf.mxu0
    %3362 = vdwg.mxu0
    %3363 = vst [vmem:[#allocation14] sm:$0xff] %v3358
    // Predicated region
    $region74: #{tpu_custom_call.1} parent=1 // pred_check
      _
    $region75: #{tpu_custom_call.1} parent=1 // pred_check_branch
      %3365 = sbr.rel (0) target = $region77
    $region76: #{tpu_custom_call.1} parent=1 // pred_region
      %s3367 = ssub.s32 128, 128
      %3368 = vsyncadd [#allocation4], %s3367
      %s3370 = sshll.u32 [#allocation14], 4
      %s3371 = int_to_ptr.vmem [resolvable:$true] %s3370
      %3373 = dma.vmem_to_hbm [thread:$0]  %s3371, 128, %s11, [#allocation4]
    $region77: #{tpu_custom_call.1} parent=1 // pred_fallthru
      _
    // Predicated region
    $region78: #{tpu_custom_call.1} parent=1 // pred_check
      _
    $region79: #{tpu_custom_call.1} parent=1 // pred_check_branch
      %3375 = sbr.rel (0) target = $region81
    $region80: #{tpu_custom_call.1} parent=1 // pred_region
      %3376 = dma.done [#allocation4], 128
    $region81: #{tpu_custom_call.1} parent=1 // pred_fallthru
      _
    %3377 = vsyncpa [#allocation3], 1
    %3378 = vsyncpa [#allocation6], 1
    %3379 = vsyncpa [#allocation9], 1
    %3380 = vsyncpa [#allocation12], 1
    %3381 = vsyncpa [#allocation4], 1

</llo_original>
